<compile_context>
chip_gen: v7x
topology: tpu7x:2x2x1
jax: 0.10.0
libtpu: 0.0.40
codegen_flags: <defaults>
</compile_context>

<pallas_src>
import functools
import numpy as np
import jax
import jax.numpy as jnp
from jax import lax
from jax.experimental import pallas as pl
from jax.experimental.pallas import tpu as pltpu

# ---- model hyper-parameters (from the module __init__) ---------------------
N_TYPES = 8
EMBED_DIM = 16
HIDDEN = 32
NUM_LAYERS = 2
# TODO(synk): nn.Dropout is an eval-mode identity; it is not lowered anywhere.


# ---------------------------------------------------------------------------
# Pallas kernel: one grid step == one (batch block, time chunk)
# Layout is batch-in-lanes: gates are [4H, Bb], state is [H, Bb], Bb = lanes.
# ---------------------------------------------------------------------------
def _lstm_chunk_kernel(gates0_ref,      # [Tt, 4H, Bb] precomputed layer-0 gates (W_ih0 @ x + b0)
                       w_hh0_ref,       # [4H, H]      layer-0 recurrent weight (PyTorch orientation)
                       w_cat_ref,       # [L-1, 4H, 2H] fused [W_ih_l | W_hh_l] for layers >= 1
                       b_ref,           # [L-1, 4H, 1]  fused biases for layers >= 1
                       out_ref,         # [Tt, H, Bb]  last-layer hidden states
                       h_scr, c_scr,    # [L, H, Bb]   carried LSTM state (VMEM)
                       *, num_layers, hidden, chunk, unroll):
    H = hidden
    Bb = gates0_ref.shape[2]

    # State reset at the start of each batch block's time sweep.
    # NOTE: correctness relies on the time axis being the innermost grid axis
    # and marked "arbitrary" (sequential) — do not reorder the grid.
    @pl.when(pl.program_id(1) == 0)
    def _init():
        h_scr[...] = jnp.zeros_like(h_scr)
        c_scr[...] = jnp.zeros_like(c_scr)

    # Hoist loop-invariant weight loads / broadcasts out of the recurrence.
    w_hh0 = w_hh0_ref[...]                                       # [4H, H]
    w_cat = [w_cat_ref[l] for l in range(num_layers - 1)]        # each [4H, 2H]
    b_full = [jnp.broadcast_to(b_ref[l], (4 * H, Bb))
              for l in range(num_layers - 1)]                    # each [4H, Bb]

    h_init = tuple(h_scr[l] for l in range(num_layers))          # each [H, Bb]
    c_init = tuple(c_scr[l] for l in range(num_layers))

    def step(t, carry):
        hs, cs = carry
        new_h, new_c = [], []
        x = None
        g0 = gates0_ref[t]                                       # [4H, Bb]
        for l in range(num_layers):
            if l == 0:
                gates = g0 + jnp.dot(w_hh0, hs[0],
                                     preferred_element_type=jnp.float32)
            else:
                # Single fused matmul: [4H, 2H] @ [[x];[h_l]] (K = 2H).
                xh = jnp.concatenate([x, hs[l]], axis=0)         # [2H, Bb]
                gates = (jnp.dot(w_cat[l - 1], xh,
                                 preferred_element_type=jnp.float32)
                         + b_full[l - 1])                        # [4H, Bb]
            # PyTorch LSTM gate order: i, f, g, o — clean sublane slices.
            i = jax.nn.sigmoid(gates[0 * H:1 * H, :])
            f = jax.nn.sigmoid(gates[1 * H:2 * H, :])
            g = jnp.tanh(gates[2 * H:3 * H, :])
            o = jax.nn.sigmoid(gates[3 * H:4 * H, :])
            c_n = f * cs[l] + i * g
            h_n = o * jnp.tanh(c_n)
            new_h.append(h_n)
            new_c.append(c_n)
            x = h_n
        out_ref[t] = x                                           # [H, Bb], lane-dense
        return tuple(new_h), tuple(new_c)

    hs, cs = lax.fori_loop(0, chunk, step, (h_init, c_init), unroll=unroll)

    for l in range(num_layers):
        h_scr[l] = hs[l]
        c_scr[l] = cs[l]


# ---------------------------------------------------------------------------
# Wrapper: non-recurrent work in plain JAX, recurrence in the Pallas kernel
# ---------------------------------------------------------------------------
def rmde_forward(event_seqs, target_time, params, *,
                 chunk=128, batch_block=128, unroll=4):
    """event_seqs: [B, T, 2] (time, type-id); target_time: [B, T] or [1, T].

    On v7x, pick batch_block so that ceil(B / batch_block) >= 2 when B allows,
    so the "parallel" batch axis shards across both TensorCores.
    """
    B, T, _ = event_seqs.shape
    H = HIDDEN
    times = event_seqs[:, :, 0].astype(jnp.float32)
    types = event_seqs[:, :, 1].astype(jnp.int32)

    padded_time = jnp.pad(times, ((0, 0), (1, 0)))
    temp_feat = (padded_time[:, 1:] - padded_time[:, :-1])[..., None]   # [B,T,1]
    onehot = jax.nn.one_hot(types, N_TYPES, dtype=jnp.float32)          # [B,T,n]
    type_feat = onehot @ params["w_embed"].T                            # [B,T,E]
    feat = jnp.concatenate([temp_feat, type_feat], axis=-1)             # [B,T,E+1]

    # Layer-0 input projection, emitted directly in the kernel's
    # time-major / feature-major / batch-in-lanes layout (no extra transpose
    # round trip through HBM).
    b0 = params["b_ih"][0] + params["b_hh"][0]                          # [4H]
    gates0_tm = (jnp.einsum("btf,gf->tgb", feat, params["w_ih"][0])
                 + b0[None, :, None])                                   # [T,4H,B]

    # Pad batch to a lane multiple (128) and time to a chunk multiple.
    Bb = batch_block
    B_pad = -(-B // Bb) * Bb
    Tt = min(chunk, T)
    T_pad = -(-T // Tt) * Tt
    gates0_tm = jnp.pad(gates0_tm,
                        ((0, T_pad - T), (0, 0), (0, B_pad - B)))

    # Weights in W @ x orientation (PyTorch's native [4H, K] — no transposes).
    w_hh0 = params["w_hh"][0]                                           # [4H, H]
    w_cat = jnp.stack([jnp.concatenate([params["w_ih"][l],
                                        params["w_hh"][l]], axis=1)
                       for l in range(1, NUM_LAYERS)])                  # [L-1,4H,2H]
    b_rest = jnp.stack([(params["b_ih"][l] + params["b_hh"][l])[:, None]
                        for l in range(1, NUM_LAYERS)])                 # [L-1,4H,1]

    n_bb = B_pad // Bb
    n_ct = T_pad // Tt

    kernel = functools.partial(_lstm_chunk_kernel, num_layers=NUM_LAYERS,
                               hidden=H, chunk=Tt, unroll=min(unroll, Tt))

    h_tm = pl.pallas_call(
        kernel,
        out_shape=jax.ShapeDtypeStruct((T_pad, H, B_pad), jnp.float32),
        grid=(n_bb, n_ct),
        in_specs=[
            pl.BlockSpec((Tt, 4 * H, Bb), lambda b, c: (c, 0, b)),
            pl.BlockSpec((4 * H, H), lambda b, c: (0, 0)),
            pl.BlockSpec((NUM_LAYERS - 1, 4 * H, 2 * H), lambda b, c: (0, 0, 0)),
            pl.BlockSpec((NUM_LAYERS - 1, 4 * H, 1), lambda b, c: (0, 0, 0)),
        ],
        out_specs=pl.BlockSpec((Tt, H, Bb), lambda b, c: (c, 0, b)),
        scratch_shapes=[pltpu.VMEM((NUM_LAYERS, H, Bb), jnp.float32),
                        pltpu.VMEM((NUM_LAYERS, H, Bb), jnp.float32)],
        compiler_params=pltpu.CompilerParams(
            # Time axis MUST stay innermost and "arbitrary": the VMEM-carried
            # h/c state is only valid if time chunks run sequentially per
            # batch block.
            dimension_semantics=("parallel", "arbitrary"),
            # Tt=128, Bb=128 f32 tiles double-buffered ~= 20 MiB; 48 MiB limit
            # leaves headroom while staying under v7x's 64 MiB physical VMEM.
            vmem_limit_bytes=48 * 1024 * 1024),
    )(gates0_tm, w_hh0, w_cat, b_rest)

    h_tm = h_tm[:T, :, :B]                                              # [T,H,B]

    # Final fc hoisted out of the kernel; the ttt concat folds into a rank-1
    # term, and the einsum consumes the kernel's [T,H,B] layout directly.
    ttt = jnp.broadcast_to(target_time, (B, T)) - times                 # [B,T]
    w_fc_h = params["w_fc"][:, :H]                                      # [n,H]
    w_fc_t = params["w_fc"][:, H]                                       # [n]
    logits = (jnp.einsum("thb,nh->btn", h_tm, w_fc_h)
              + ttt[..., None] * w_fc_t[None, None, :]
              + params["b_fc"][None, None, :])                          # [B,T,n]
    return logits


# ---------------------------------------------------------------------------
# Pure-JAX reference (mirrors the PyTorch forward) for a correctness check
# ---------------------------------------------------------------------------
def reference_forward(event_seqs, target_time, params):
    B, T, _ = event_seqs.shape
    times = event_seqs[:, :, 0].astype(jnp.float32)
    types = event_seqs[:, :, 1].astype(jnp.int32)
    padded_time = jnp.pad(times, ((0, 0), (1, 0)))
    temp_feat = (padded_time[:, 1:] - padded_time[:, :-1])[..., None]
    onehot = jax.nn.one_hot(types, N_TYPES, dtype=jnp.float32)
    type_feat = onehot @ params["w_embed"].T
    x = jnp.concatenate([temp_feat, type_feat], axis=-1)
    for l in range(NUM_LAYERS):
        w_ih, w_hh = params["w_ih"][l], params["w_hh"][l]
        b = params["b_ih"][l] + params["b_hh"][l]

        def step(carry, x_t, w_ih=w_ih, w_hh=w_hh, b=b):
            h, c = carry
            gates = x_t @ w_ih.T + h @ w_hh.T + b
            H = HIDDEN
            i = jax.nn.sigmoid(gates[:, :H])
            f = jax.nn.sigmoid(gates[:, H:2 * H])
            g = jnp.tanh(gates[:, 2 * H:3 * H])
            o = jax.nn.sigmoid(gates[:, 3 * H:])
            c = f * c + i * g
            h = o * jnp.tanh(c)
            return (h, c), h

        init = (jnp.zeros((B, HIDDEN), jnp.float32),
                jnp.zeros((B, HIDDEN), jnp.float32))
        _, ys = jax.lax.scan(step, init, jnp.swapaxes(x, 0, 1))
        x = jnp.swapaxes(ys, 0, 1)
    ttt = (jnp.broadcast_to(target_time, (B, T)) - times)[..., None]
    combined = jnp.concatenate([x, ttt], axis=-1)
    return combined @ params["w_fc"].T + params["b_fc"]


# ---------------------------------------------------------------------------
# Deterministic parameter init (shapes match the nn.Module)
# ---------------------------------------------------------------------------
def init_params(key):
    keys = iter(jax.random.split(key, 3 + 4 * NUM_LAYERS))
    u = lambda k, shape: jax.random.uniform(k, shape, jnp.float32, -0.1, 0.1)
    in_dims = (EMBED_DIM + 1,) + (HIDDEN,) * (NUM_LAYERS - 1)
    params = {
        "w_embed": u(next(keys), (EMBED_DIM, N_TYPES)),        # embed.weight
        "w_fc": u(next(keys), (N_TYPES, HIDDEN + 1)),          # fc.weight
        "b_fc": u(next(keys), (N_TYPES,)),                     # fc.bias
        "w_ih": [], "w_hh": [], "b_ih": [], "b_hh": [],
    }
    for l in range(NUM_LAYERS):
        params["w_ih"].append(u(next(keys), (4 * HIDDEN, in_dims[l])))
        params["w_hh"].append(u(next(keys), (4 * HIDDEN, HIDDEN)))
        params["b_ih"].append(u(next(keys), (4 * HIDDEN,)))
        params["b_hh"].append(u(next(keys), (4 * HIDDEN,)))
    return params


if __name__ == "__main__":
    key = jax.random.PRNGKey(0)
    kparam, kdata = jax.random.split(key)
    params = init_params(kparam)

    B, T = 2, 8
    kt, ktyp, ktgt = jax.random.split(kdata, 3)
    dt = jax.random.uniform(kt, (B, T), jnp.float32, 0.1, 1.0)
    times = jnp.cumsum(dt, axis=1)
    types = jax.random.randint(ktyp, (B, T), 0, N_TYPES)
    event_seqs = jnp.concatenate(
        [times[..., None], types.astype(jnp.float32)[..., None]], axis=-1)
    target_time = times + jax.random.uniform(ktgt, (B, T), jnp.float32, 0.1, 1.0)

    # chunk=3 deliberately forces multiple time chunks (state carry across
    # grid steps) plus time padding on the last chunk.
    out = rmde_forward(event_seqs, target_time, params, chunk=3)
    out = jax.block_until_ready(out)

    ref = reference_forward(event_seqs, target_time, params)
    np.testing.assert_allclose(np.asarray(out), np.asarray(ref),
                               rtol=1e-4, atol=1e-4)
    print("KERNEL_OK")
</pallas_src>

<mosaic_0001>
module attributes {stable_mosaic.version = 11 : i64} {
  func.func @_lstm_chunk_kernel(%arg0: i32, %arg1: i32, %arg2: memref<3x128x128xf32, #tpu.memory_space<vmem>>, %arg3: memref<128x32xf32, #tpu.memory_space<vmem>>, %arg4: memref<1x128x64xf32, #tpu.memory_space<vmem>>, %arg5: memref<1x128x1xf32, #tpu.memory_space<vmem>>, %arg6: memref<3x32x128xf32, #tpu.memory_space<vmem>>, %arg7: memref<2x32x128xf32, #tpu.memory_space<vmem>>, %arg8: memref<2x32x128xf32, #tpu.memory_space<vmem>>) attributes {dimension_semantics = [#tpu.dimension_semantics<parallel>, #tpu.dimension_semantics<arbitrary>], iteration_bounds = array<i64: 1, 3>, scalar_prefetch = 0 : i64, scratch_operands = 2 : i64, tpu.core_type = #tpu.core_type<tc>, window_params = [{transform_indices = @transform_0, window_bounds = array<i64: 3, 128, 128>}, {pipeline_mode = #tpu.pipeline_mode<synchronous>, transform_indices = @transform_1, window_bounds = array<i64: 128, 32>}, {pipeline_mode = #tpu.pipeline_mode<synchronous>, transform_indices = @transform_2, window_bounds = array<i64: 1, 128, 64>}, {pipeline_mode = #tpu.pipeline_mode<synchronous>, transform_indices = @transform_3, window_bounds = array<i64: 1, 128, 1>}, {transform_indices = @transform_4, window_bounds = array<i64: 3, 32, 128>}]} {
    %c0_i32 = arith.constant 0 : i32
    %0 = arith.cmpi eq, %arg1, %c0_i32 : i32
    %1 = arith.extui %0 : i1 to i32
    %c0_i32_0 = arith.constant 0 : i32
    %2 = arith.cmpi ne, %1, %c0_i32_0 : i32
    scf.if %2 {
      %cst_67 = arith.constant 0.000000e+00 : f32
      %216 = vector.broadcast %cst_67 : f32 to vector<2x32x128xf32>
      %c0_68 = arith.constant 0 : index
      %c0_69 = arith.constant 0 : index
      %c0_70 = arith.constant 0 : index
      %217 = vector.load %arg7[%c0_68, %c0_69, %c0_70] : memref<2x32x128xf32, #tpu.memory_space<vmem>>, vector<2x32x128xf32>
      tpu.vector_store %arg7[%c0_68, %c0_69, %c0_70], %216 {strides = array<i32>} : memref<2x32x128xf32, #tpu.memory_space<vmem>>, vector<2x32x128xf32>,
      %cst_71 = arith.constant 0.000000e+00 : f32
      %218 = vector.broadcast %cst_71 : f32 to vector<2x32x128xf32>
      %c0_72 = arith.constant 0 : index
      %c0_73 = arith.constant 0 : index
      %c0_74 = arith.constant 0 : index
      %219 = vector.load %arg8[%c0_72, %c0_73, %c0_74] : memref<2x32x128xf32, #tpu.memory_space<vmem>>, vector<2x32x128xf32>
      tpu.vector_store %arg8[%c0_72, %c0_73, %c0_74], %218 {strides = array<i32>} : memref<2x32x128xf32, #tpu.memory_space<vmem>>, vector<2x32x128xf32>,
    } else {
    }
    %c0 = arith.constant 0 : index
    %c0_1 = arith.constant 0 : index
    %3 = vector.load %arg3[%c0, %c0_1] : memref<128x32xf32, #tpu.memory_space<vmem>>, vector<128x32xf32>
    %c0_2 = arith.constant 0 : index
    %c0_3 = arith.constant 0 : index
    %c0_4 = arith.constant 0 : index
    %4 = vector.load %arg4[%c0_2, %c0_3, %c0_4] : memref<1x128x64xf32, #tpu.memory_space<vmem>>, vector<1x128x64xf32>
    %5 = vector.shape_cast %4 : vector<1x128x64xf32> to vector<128x64xf32>
    %c0_5 = arith.constant 0 : index
    %c0_6 = arith.constant 0 : index
    %c0_7 = arith.constant 0 : index
    %6 = vector.load %arg5[%c0_5, %c0_6, %c0_7] : memref<1x128x1xf32, #tpu.memory_space<vmem>>, vector<1x128x1xf32>
    %7 = vector.shape_cast %6 : vector<1x128x1xf32> to vector<128x1xf32>
    %8 = vector.shape_cast %7 : vector<128x1xf32> to vector<128x1xf32>
    %9 = vector.broadcast %8 : vector<128x1xf32> to vector<128x128xf32>
    %c0_8 = arith.constant 0 : index
    %c0_9 = arith.constant 0 : index
    %c0_10 = arith.constant 0 : index
    %10 = vector.load %arg7[%c0_8, %c0_9, %c0_10] : memref<2x32x128xf32, #tpu.memory_space<vmem>>, vector<1x32x128xf32>
    %11 = vector.shape_cast %10 : vector<1x32x128xf32> to vector<32x128xf32>
    %c1 = arith.constant 1 : index
    %c0_11 = arith.constant 0 : index
    %c0_12 = arith.constant 0 : index
    %12 = vector.load %arg7[%c1, %c0_11, %c0_12] : memref<2x32x128xf32, #tpu.memory_space<vmem>>, vector<1x32x128xf32>
    %13 = vector.shape_cast %12 : vector<1x32x128xf32> to vector<32x128xf32>
    %c0_13 = arith.constant 0 : index
    %c0_14 = arith.constant 0 : index
    %c0_15 = arith.constant 0 : index
    %14 = vector.load %arg8[%c0_13, %c0_14, %c0_15] : memref<2x32x128xf32, #tpu.memory_space<vmem>>, vector<1x32x128xf32>
    %15 = vector.shape_cast %14 : vector<1x32x128xf32> to vector<32x128xf32>
    %c1_16 = arith.constant 1 : index
    %c0_17 = arith.constant 0 : index
    %c0_18 = arith.constant 0 : index
    %16 = vector.load %arg8[%c1_16, %c0_17, %c0_18] : memref<2x32x128xf32, #tpu.memory_space<vmem>>, vector<1x32x128xf32>
    %17 = vector.shape_cast %16 : vector<1x32x128xf32> to vector<32x128xf32>
    %c0_i32_19 = arith.constant 0 : i32
    %18 = arith.index_cast %c0_i32_19 : i32 to index
    %c0_20 = arith.constant 0 : index
    %c0_21 = arith.constant 0 : index
    %19 = vector.load %arg2[%18, %c0_20, %c0_21] : memref<3x128x128xf32, #tpu.memory_space<vmem>>, vector<1x128x128xf32>
    %20 = vector.shape_cast %19 : vector<1x128x128xf32> to vector<128x128xf32>
    %cst = arith.constant dense<0.000000e+00> : vector<128x128xf32>
    %21 = tpu.matmul %3, %11, %cst {dimension_numbers = #tpu.dot_dimension_numbers<[1], [0], [0], [1], [0, 0, 1, 1], [], []>} : vector<128x32xf32>, vector<32x128xf32>, vector<128x128xf32> -> vector<128x128xf32>
    %22 = arith.addf %20, %21 : vector<128x128xf32>
    %23 = vector.extract_strided_slice %22 {offsets = [0, 0], sizes = [32, 128], strides = [1, 1]} : vector<128x128xf32> to vector<32x128xf32>
    %24 = arith.negf %23 : vector<32x128xf32>
    %25 = math.exp %24 : vector<32x128xf32>
    %cst_22 = arith.constant 1.000000e+00 : f32
    %26 = vector.broadcast %cst_22 : f32 to vector<32x128xf32>
    %27 = arith.addf %26, %25 : vector<32x128xf32>
    %28 = arith.divf %26, %27 : vector<32x128xf32>
    %29 = vector.extract_strided_slice %22 {offsets = [32, 0], sizes = [32, 128], strides = [1, 1]} : vector<128x128xf32> to vector<32x128xf32>
    %30 = arith.negf %29 : vector<32x128xf32>
    %31 = math.exp %30 : vector<32x128xf32>
    %cst_23 = arith.constant 1.000000e+00 : f32
    %32 = vector.broadcast %cst_23 : f32 to vector<32x128xf32>
    %33 = arith.addf %32, %31 : vector<32x128xf32>
    %34 = arith.divf %32, %33 : vector<32x128xf32>
    %35 = vector.extract_strided_slice %22 {offsets = [64, 0], sizes = [32, 128], strides = [1, 1]} : vector<128x128xf32> to vector<32x128xf32>
    %36 = math.tanh %35 : vector<32x128xf32>
    %37 = vector.extract_strided_slice %22 {offsets = [96, 0], sizes = [32, 128], strides = [1, 1]} : vector<128x128xf32> to vector<32x128xf32>
    %38 = arith.negf %37 : vector<32x128xf32>
    %39 = math.exp %38 : vector<32x128xf32>
    %cst_24 = arith.constant 1.000000e+00 : f32
    %40 = vector.broadcast %cst_24 : f32 to vector<32x128xf32>
    %41 = arith.addf %40, %39 : vector<32x128xf32>
    %42 = arith.divf %40, %41 : vector<32x128xf32>
    %43 = arith.mulf %34, %15 : vector<32x128xf32>
    %44 = arith.mulf %28, %36 : vector<32x128xf32>
    %45 = arith.addf %43, %44 : vector<32x128xf32>
    %46 = math.tanh %45 : vector<32x128xf32>
    %47 = arith.mulf %42, %46 : vector<32x128xf32>
    %48 = tpu.concatenate %47, %13 in 0 : vector<32x128xf32>, vector<32x128xf32> -> vector<64x128xf32>
    %cst_25 = arith.constant dense<0.000000e+00> : vector<128x128xf32>
    %49 = tpu.matmul %5, %48, %cst_25 {dimension_numbers = #tpu.dot_dimension_numbers<[1], [0], [0], [1], [0, 0, 1, 1], [], []>} : vector<128x64xf32>, vector<64x128xf32>, vector<128x128xf32> -> vector<128x128xf32>
    %50 = arith.addf %49, %9 : vector<128x128xf32>
    %51 = vector.extract_strided_slice %50 {offsets = [0, 0], sizes = [32, 128], strides = [1, 1]} : vector<128x128xf32> to vector<32x128xf32>
    %52 = arith.negf %51 : vector<32x128xf32>
    %53 = math.exp %52 : vector<32x128xf32>
    %cst_26 = arith.constant 1.000000e+00 : f32
    %54 = vector.broadcast %cst_26 : f32 to vector<32x128xf32>
    %55 = arith.addf %54, %53 : vector<32x128xf32>
    %56 = arith.divf %54, %55 : vector<32x128xf32>
    %57 = vector.extract_strided_slice %50 {offsets = [32, 0], sizes = [32, 128], strides = [1, 1]} : vector<128x128xf32> to vector<32x128xf32>
    %58 = arith.negf %57 : vector<32x128xf32>
    %59 = math.exp %58 : vector<32x128xf32>
    %cst_27 = arith.constant 1.000000e+00 : f32
    %60 = vector.broadcast %cst_27 : f32 to vector<32x128xf32>
    %61 = arith.addf %60, %59 : vector<32x128xf32>
    %62 = arith.divf %60, %61 : vector<32x128xf32>
    %63 = vector.extract_strided_slice %50 {offsets = [64, 0], sizes = [32, 128], strides = [1, 1]} : vector<128x128xf32> to vector<32x128xf32>
    %64 = math.tanh %63 : vector<32x128xf32>
    %65 = vector.extract_strided_slice %50 {offsets = [96, 0], sizes = [32, 128], strides = [1, 1]} : vector<128x128xf32> to vector<32x128xf32>
    %66 = arith.negf %65 : vector<32x128xf32>
    %67 = math.exp %66 : vector<32x128xf32>
    %cst_28 = arith.constant 1.000000e+00 : f32
    %68 = vector.broadcast %cst_28 : f32 to vector<32x128xf32>
    %69 = arith.addf %68, %67 : vector<32x128xf32>
    %70 = arith.divf %68, %69 : vector<32x128xf32>
    %71 = arith.mulf %62, %17 : vector<32x128xf32>
    %72 = arith.mulf %56, %64 : vector<32x128xf32>
    %73 = arith.addf %71, %72 : vector<32x128xf32>
    %74 = math.tanh %73 : vector<32x128xf32>
    %75 = arith.mulf %70, %74 : vector<32x128xf32>
    %76 = arith.index_cast %c0_i32_19 : i32 to index
    %c0_29 = arith.constant 0 : index
    %c0_30 = arith.constant 0 : index
    %77 = vector.load %arg6[%76, %c0_29, %c0_30] : memref<3x32x128xf32, #tpu.memory_space<vmem>>, vector<1x32x128xf32>
    %78 = vector.shape_cast %77 : vector<1x32x128xf32> to vector<32x128xf32>
    %79 = vector.shape_cast %75 : vector<32x128xf32> to vector<1x32x128xf32>
    tpu.vector_store %arg6[%76, %c0_29, %c0_30], %79 {strides = array<i32>} : memref<3x32x128xf32, #tpu.memory_space<vmem>>, vector<1x32x128xf32>,
    %c1_i32 = arith.constant 1 : i32
    %80 = arith.index_cast %c1_i32 : i32 to index
    %c0_31 = arith.constant 0 : index
    %c0_32 = arith.constant 0 : index
    %81 = vector.load %arg2[%80, %c0_31, %c0_32] : memref<3x128x128xf32, #tpu.memory_space<vmem>>, vector<1x128x128xf32>
    %82 = vector.shape_cast %81 : vector<1x128x128xf32> to vector<128x128xf32>
    %cst_33 = arith.constant dense<0.000000e+00> : vector<128x128xf32>
    %83 = tpu.matmul %3, %47, %cst_33 {dimension_numbers = #tpu.dot_dimension_numbers<[1], [0], [0], [1], [0, 0, 1, 1], [], []>} : vector<128x32xf32>, vector<32x128xf32>, vector<128x128xf32> -> vector<128x128xf32>
    %84 = arith.addf %82, %83 : vector<128x128xf32>
    %85 = vector.extract_strided_slice %84 {offsets = [0, 0], sizes = [32, 128], strides = [1, 1]} : vector<128x128xf32> to vector<32x128xf32>
    %86 = arith.negf %85 : vector<32x128xf32>
    %87 = math.exp %86 : vector<32x128xf32>
    %cst_34 = arith.constant 1.000000e+00 : f32
    %88 = vector.broadcast %cst_34 : f32 to vector<32x128xf32>
    %89 = arith.addf %88, %87 : vector<32x128xf32>
    %90 = arith.divf %88, %89 : vector<32x128xf32>
    %91 = vector.extract_strided_slice %84 {offsets = [32, 0], sizes = [32, 128], strides = [1, 1]} : vector<128x128xf32> to vector<32x128xf32>
    %92 = arith.negf %91 : vector<32x128xf32>
    %93 = math.exp %92 : vector<32x128xf32>
    %cst_35 = arith.constant 1.000000e+00 : f32
    %94 = vector.broadcast %cst_35 : f32 to vector<32x128xf32>
    %95 = arith.addf %94, %93 : vector<32x128xf32>
    %96 = arith.divf %94, %95 : vector<32x128xf32>
    %97 = vector.extract_strided_slice %84 {offsets = [64, 0], sizes = [32, 128], strides = [1, 1]} : vector<128x128xf32> to vector<32x128xf32>
    %98 = math.tanh %97 : vector<32x128xf32>
    %99 = vector.extract_strided_slice %84 {offsets = [96, 0], sizes = [32, 128], strides = [1, 1]} : vector<128x128xf32> to vector<32x128xf32>
    %100 = arith.negf %99 : vector<32x128xf32>
    %101 = math.exp %100 : vector<32x128xf32>
    %cst_36 = arith.constant 1.000000e+00 : f32
    %102 = vector.broadcast %cst_36 : f32 to vector<32x128xf32>
    %103 = arith.addf %102, %101 : vector<32x128xf32>
    %104 = arith.divf %102, %103 : vector<32x128xf32>
    %105 = arith.mulf %96, %45 : vector<32x128xf32>
    %106 = arith.mulf %90, %98 : vector<32x128xf32>
    %107 = arith.addf %105, %106 : vector<32x128xf32>
    %108 = math.tanh %107 : vector<32x128xf32>
    %109 = arith.mulf %104, %108 : vector<32x128xf32>
    %110 = tpu.concatenate %109, %75 in 0 : vector<32x128xf32>, vector<32x128xf32> -> vector<64x128xf32>
    %cst_37 = arith.constant dense<0.000000e+00> : vector<128x128xf32>
    %111 = tpu.matmul %5, %110, %cst_37 {dimension_numbers = #tpu.dot_dimension_numbers<[1], [0], [0], [1], [0, 0, 1, 1], [], []>} : vector<128x64xf32>, vector<64x128xf32>, vector<128x128xf32> -> vector<128x128xf32>
    %112 = arith.addf %111, %9 : vector<128x128xf32>
    %113 = vector.extract_strided_slice %112 {offsets = [0, 0], sizes = [32, 128], strides = [1, 1]} : vector<128x128xf32> to vector<32x128xf32>
    %114 = arith.negf %113 : vector<32x128xf32>
    %115 = math.exp %114 : vector<32x128xf32>
    %cst_38 = arith.constant 1.000000e+00 : f32
    %116 = vector.broadcast %cst_38 : f32 to vector<32x128xf32>
    %117 = arith.addf %116, %115 : vector<32x128xf32>
    %118 = arith.divf %116, %117 : vector<32x128xf32>
    %119 = vector.extract_strided_slice %112 {offsets = [32, 0], sizes = [32, 128], strides = [1, 1]} : vector<128x128xf32> to vector<32x128xf32>
    %120 = arith.negf %119 : vector<32x128xf32>
    %121 = math.exp %120 : vector<32x128xf32>
    %cst_39 = arith.constant 1.000000e+00 : f32
    %122 = vector.broadcast %cst_39 : f32 to vector<32x128xf32>
    %123 = arith.addf %122, %121 : vector<32x128xf32>
    %124 = arith.divf %122, %123 : vector<32x128xf32>
    %125 = vector.extract_strided_slice %112 {offsets = [64, 0], sizes = [32, 128], strides = [1, 1]} : vector<128x128xf32> to vector<32x128xf32>
    %126 = math.tanh %125 : vector<32x128xf32>
    %127 = vector.extract_strided_slice %112 {offsets = [96, 0], sizes = [32, 128], strides = [1, 1]} : vector<128x128xf32> to vector<32x128xf32>
    %128 = arith.negf %127 : vector<32x128xf32>
    %129 = math.exp %128 : vector<32x128xf32>
    %cst_40 = arith.constant 1.000000e+00 : f32
    %130 = vector.broadcast %cst_40 : f32 to vector<32x128xf32>
    %131 = arith.addf %130, %129 : vector<32x128xf32>
    %132 = arith.divf %130, %131 : vector<32x128xf32>
    %133 = arith.mulf %124, %73 : vector<32x128xf32>
    %134 = arith.mulf %118, %126 : vector<32x128xf32>
    %135 = arith.addf %133, %134 : vector<32x128xf32>
    %136 = math.tanh %135 : vector<32x128xf32>
    %137 = arith.mulf %132, %136 : vector<32x128xf32>
    %138 = arith.index_cast %c1_i32 : i32 to index
    %c0_41 = arith.constant 0 : index
    %c0_42 = arith.constant 0 : index
    %139 = vector.load %arg6[%138, %c0_41, %c0_42] : memref<3x32x128xf32, #tpu.memory_space<vmem>>, vector<1x32x128xf32>
    %140 = vector.shape_cast %139 : vector<1x32x128xf32> to vector<32x128xf32>
    %141 = vector.shape_cast %137 : vector<32x128xf32> to vector<1x32x128xf32>
    tpu.vector_store %arg6[%138, %c0_41, %c0_42], %141 {strides = array<i32>} : memref<3x32x128xf32, #tpu.memory_space<vmem>>, vector<1x32x128xf32>,
    %c2_i32 = arith.constant 2 : i32
    %142 = arith.index_cast %c2_i32 : i32 to index
    %c0_43 = arith.constant 0 : index
    %c0_44 = arith.constant 0 : index
    %143 = vector.load %arg2[%142, %c0_43, %c0_44] : memref<3x128x128xf32, #tpu.memory_space<vmem>>, vector<1x128x128xf32>
    %144 = vector.shape_cast %143 : vector<1x128x128xf32> to vector<128x128xf32>
    %cst_45 = arith.constant dense<0.000000e+00> : vector<128x128xf32>
    %145 = tpu.matmul %3, %109, %cst_45 {dimension_numbers = #tpu.dot_dimension_numbers<[1], [0], [0], [1], [0, 0, 1, 1], [], []>} : vector<128x32xf32>, vector<32x128xf32>, vector<128x128xf32> -> vector<128x128xf32>
    %146 = arith.addf %144, %145 : vector<128x128xf32>
    %147 = vector.extract_strided_slice %146 {offsets = [0, 0], sizes = [32, 128], strides = [1, 1]} : vector<128x128xf32> to vector<32x128xf32>
    %148 = arith.negf %147 : vector<32x128xf32>
    %149 = math.exp %148 : vector<32x128xf32>
    %cst_46 = arith.constant 1.000000e+00 : f32
    %150 = vector.broadcast %cst_46 : f32 to vector<32x128xf32>
    %151 = arith.addf %150, %149 : vector<32x128xf32>
    %152 = arith.divf %150, %151 : vector<32x128xf32>
    %153 = vector.extract_strided_slice %146 {offsets = [32, 0], sizes = [32, 128], strides = [1, 1]} : vector<128x128xf32> to vector<32x128xf32>
    %154 = arith.negf %153 : vector<32x128xf32>
    %155 = math.exp %154 : vector<32x128xf32>
    %cst_47 = arith.constant 1.000000e+00 : f32
    %156 = vector.broadcast %cst_47 : f32 to vector<32x128xf32>
    %157 = arith.addf %156, %155 : vector<32x128xf32>
    %158 = arith.divf %156, %157 : vector<32x128xf32>
    %159 = vector.extract_strided_slice %146 {offsets = [64, 0], sizes = [32, 128], strides = [1, 1]} : vector<128x128xf32> to vector<32x128xf32>
    %160 = math.tanh %159 : vector<32x128xf32>
    %161 = vector.extract_strided_slice %146 {offsets = [96, 0], sizes = [32, 128], strides = [1, 1]} : vector<128x128xf32> to vector<32x128xf32>
    %162 = arith.negf %161 : vector<32x128xf32>
    %163 = math.exp %162 : vector<32x128xf32>
    %cst_48 = arith.constant 1.000000e+00 : f32
    %164 = vector.broadcast %cst_48 : f32 to vector<32x128xf32>
    %165 = arith.addf %164, %163 : vector<32x128xf32>
    %166 = arith.divf %164, %165 : vector<32x128xf32>
    %167 = arith.mulf %158, %107 : vector<32x128xf32>
    %168 = arith.mulf %152, %160 : vector<32x128xf32>
    %169 = arith.addf %167, %168 : vector<32x128xf32>
    %170 = math.tanh %169 : vector<32x128xf32>
    %171 = arith.mulf %166, %170 : vector<32x128xf32>
    %172 = tpu.concatenate %171, %137 in 0 : vector<32x128xf32>, vector<32x128xf32> -> vector<64x128xf32>
    %cst_49 = arith.constant dense<0.000000e+00> : vector<128x128xf32>
    %173 = tpu.matmul %5, %172, %cst_49 {dimension_numbers = #tpu.dot_dimension_numbers<[1], [0], [0], [1], [0, 0, 1, 1], [], []>} : vector<128x64xf32>, vector<64x128xf32>, vector<128x128xf32> -> vector<128x128xf32>
    %174 = arith.addf %173, %9 : vector<128x128xf32>
    %175 = vector.extract_strided_slice %174 {offsets = [0, 0], sizes = [32, 128], strides = [1, 1]} : vector<128x128xf32> to vector<32x128xf32>
    %176 = arith.negf %175 : vector<32x128xf32>
    %177 = math.exp %176 : vector<32x128xf32>
    %cst_50 = arith.constant 1.000000e+00 : f32
    %178 = vector.broadcast %cst_50 : f32 to vector<32x128xf32>
    %179 = arith.addf %178, %177 : vector<32x128xf32>
    %180 = arith.divf %178, %179 : vector<32x128xf32>
    %181 = vector.extract_strided_slice %174 {offsets = [32, 0], sizes = [32, 128], strides = [1, 1]} : vector<128x128xf32> to vector<32x128xf32>
    %182 = arith.negf %181 : vector<32x128xf32>
    %183 = math.exp %182 : vector<32x128xf32>
    %cst_51 = arith.constant 1.000000e+00 : f32
    %184 = vector.broadcast %cst_51 : f32 to vector<32x128xf32>
    %185 = arith.addf %184, %183 : vector<32x128xf32>
    %186 = arith.divf %184, %185 : vector<32x128xf32>
    %187 = vector.extract_strided_slice %174 {offsets = [64, 0], sizes = [32, 128], strides = [1, 1]} : vector<128x128xf32> to vector<32x128xf32>
    %188 = math.tanh %187 : vector<32x128xf32>
    %189 = vector.extract_strided_slice %174 {offsets = [96, 0], sizes = [32, 128], strides = [1, 1]} : vector<128x128xf32> to vector<32x128xf32>
    %190 = arith.negf %189 : vector<32x128xf32>
    %191 = math.exp %190 : vector<32x128xf32>
    %cst_52 = arith.constant 1.000000e+00 : f32
    %192 = vector.broadcast %cst_52 : f32 to vector<32x128xf32>
    %193 = arith.addf %192, %191 : vector<32x128xf32>
    %194 = arith.divf %192, %193 : vector<32x128xf32>
    %195 = arith.mulf %186, %135 : vector<32x128xf32>
    %196 = arith.mulf %180, %188 : vector<32x128xf32>
    %197 = arith.addf %195, %196 : vector<32x128xf32>
    %198 = math.tanh %197 : vector<32x128xf32>
    %199 = arith.mulf %194, %198 : vector<32x128xf32>
    %200 = arith.index_cast %c2_i32 : i32 to index
    %c0_53 = arith.constant 0 : index
    %c0_54 = arith.constant 0 : index
    %201 = vector.load %arg6[%200, %c0_53, %c0_54] : memref<3x32x128xf32, #tpu.memory_space<vmem>>, vector<1x32x128xf32>
    %202 = vector.shape_cast %201 : vector<1x32x128xf32> to vector<32x128xf32>
    %203 = vector.shape_cast %199 : vector<32x128xf32> to vector<1x32x128xf32>
    tpu.vector_store %arg6[%200, %c0_53, %c0_54], %203 {strides = array<i32>} : memref<3x32x128xf32, #tpu.memory_space<vmem>>, vector<1x32x128xf32>,
    %c3_i32 = arith.constant 3 : i32
    %c0_55 = arith.constant 0 : index
    %c0_56 = arith.constant 0 : index
    %c0_57 = arith.constant 0 : index
    %204 = vector.load %arg7[%c0_55, %c0_56, %c0_57] : memref<2x32x128xf32, #tpu.memory_space<vmem>>, vector<1x32x128xf32>
    %205 = vector.shape_cast %204 : vector<1x32x128xf32> to vector<32x128xf32>
    %206 = vector.shape_cast %171 : vector<32x128xf32> to vector<1x32x128xf32>
    tpu.vector_store %arg7[%c0_55, %c0_56, %c0_57], %206 {strides = array<i32>} : memref<2x32x128xf32, #tpu.memory_space<vmem>>, vector<1x32x128xf32>,
    %c0_58 = arith.constant 0 : index
    %c0_59 = arith.constant 0 : index
    %c0_60 = arith.constant 0 : index
    %207 = vector.load %arg8[%c0_58, %c0_59, %c0_60] : memref<2x32x128xf32, #tpu.memory_space<vmem>>, vector<1x32x128xf32>
    %208 = vector.shape_cast %207 : vector<1x32x128xf32> to vector<32x128xf32>
    %209 = vector.shape_cast %169 : vector<32x128xf32> to vector<1x32x128xf32>
    tpu.vector_store %arg8[%c0_58, %c0_59, %c0_60], %209 {strides = array<i32>} : memref<2x32x128xf32, #tpu.memory_space<vmem>>, vector<1x32x128xf32>,
    %c1_61 = arith.constant 1 : index
    %c0_62 = arith.constant 0 : index
    %c0_63 = arith.constant 0 : index
    %210 = vector.load %arg7[%c1_61, %c0_62, %c0_63] : memref<2x32x128xf32, #tpu.memory_space<vmem>>, vector<1x32x128xf32>
    %211 = vector.shape_cast %210 : vector<1x32x128xf32> to vector<32x128xf32>
    %212 = vector.shape_cast %199 : vector<32x128xf32> to vector<1x32x128xf32>
    tpu.vector_store %arg7[%c1_61, %c0_62, %c0_63], %212 {strides = array<i32>} : memref<2x32x128xf32, #tpu.memory_space<vmem>>, vector<1x32x128xf32>,
    %c1_64 = arith.constant 1 : index
    %c0_65 = arith.constant 0 : index
    %c0_66 = arith.constant 0 : index
    %213 = vector.load %arg8[%c1_64, %c0_65, %c0_66] : memref<2x32x128xf32, #tpu.memory_space<vmem>>, vector<1x32x128xf32>
    %214 = vector.shape_cast %213 : vector<1x32x128xf32> to vector<32x128xf32>
    %215 = vector.shape_cast %197 : vector<32x128xf32> to vector<1x32x128xf32>
    tpu.vector_store %arg8[%c1_64, %c0_65, %c0_66], %215 {strides = array<i32>} : memref<2x32x128xf32, #tpu.memory_space<vmem>>, vector<1x32x128xf32>,
    return
  }
  func.func @transform_0(%arg0: i32, %arg1: i32) -> (i32, i32, i32) {
    %c0_i32 = arith.constant 0 : i32
    %c0_i32_0 = arith.constant 0 : i32
    return %arg1, %c0_i32, %arg0 : i32, i32, i32
  }
  func.func @transform_1(%arg0: i32, %arg1: i32) -> (i32, i32) {
    %c0_i32 = arith.constant 0 : i32
    %c0_i32_0 = arith.constant 0 : i32
    %c0_i32_1 = arith.constant 0 : i32
    return %c0_i32, %c0_i32_0 : i32, i32
  }
  func.func @transform_2(%arg0: i32, %arg1: i32) -> (i32, i32, i32) {
    %c0_i32 = arith.constant 0 : i32
    %c0_i32_0 = arith.constant 0 : i32
    %c0_i32_1 = arith.constant 0 : i32
    %c0_i32_2 = arith.constant 0 : i32
    return %c0_i32, %c0_i32_0, %c0_i32_1 : i32, i32, i32
  }
  func.func @transform_3(%arg0: i32, %arg1: i32) -> (i32, i32, i32) {
    %c0_i32 = arith.constant 0 : i32
    %c0_i32_0 = arith.constant 0 : i32
    %c0_i32_1 = arith.constant 0 : i32
    %c0_i32_2 = arith.constant 0 : i32
    return %c0_i32, %c0_i32_0, %c0_i32_1 : i32, i32, i32
  }
  func.func @transform_4(%arg0: i32, %arg1: i32) -> (i32, i32, i32) {
    %c0_i32 = arith.constant 0 : i32
    %c0_i32_0 = arith.constant 0 : i32
    return %arg1, %c0_i32, %arg0 : i32, i32, i32
  }
}

</mosaic_0001>

<llo_original>
// kernel: tpu_custom_call.1
$region0: #{tpu_custom_call.1}
  #allocation0 [shape = 'u32[]', space=smem, size = 0x4, offset = 0x4, fixed_abs, tag = 'smem constant byte address 0x4 - core index']
  #allocation1 [shape = 'u32[144,128]{1,0:T(1,128)}', space=vmem, size = 0x12000, scoped, tag = 'internal scratch']
  #allocation2 [shape = 'f32[2,32,128]{2,1,0:T(8,128)}', space=vmem, size = 0x8000, scoped, tag = 'scratch operand']
  #allocation3 [shape = 'f32[2,32,128]{2,1,0:T(8,128)}', space=vmem, size = 0x8000, scoped, tag = 'scratch operand']
  %s0 = inlined_call_operand.hbm [shape: f32[9,128,128], index: 0, kind: input, shape index: {}]
  %s1 = inlined_call_operand.vmem [shape: f32[128,32], index: 1, kind: input, shape index: {}]
  %s2 = inlined_call_operand.vmem [shape: f32[1,128,64], index: 2, kind: input, shape index: {}]
  %s3 = inlined_call_operand.vmem [shape: f32[1,128,1], index: 3, kind: input, shape index: {}]
  %s4 = inlined_call_operand.hbm [shape: f32[9,32,128], index: 4, kind: output, shape index: {}]
  %s5 = sld [smem:[#allocation0]]
  $region57: #{tpu_custom_call.1} parent=0
    _
  %s7 = ssub.s32 1, %s5
  %s8 = scalar_select 0, %s7, %s5
  $region1: #{tpu_custom_call.1} parent=0
    #allocation4 [shape = 'u8[393216]{0}', space=vmem, size = 0x60000, scoped, tag = 'input window, operand 0']
    #allocation5 [shape = 's32[2]{0}', space=sflag, size = 0x8, scoped, tag = 'scoped memory for tpu_custom_call.1']
    #allocation6 [shape = 's32[2]{0}', space=sflag, size = 0x8, scoped, tag = 'scoped memory for tpu_custom_call.1']
    #allocation7 [shape = 'u8[98304]{0}', space=vmem, size = 0x18000, scoped, tag = 'output window, operand 0']
    %9 = vsyncpa [#allocation5], 0
    %s10 = scalar_lea.sflag [#allocation5], 1
    %11 = vsyncpa %s10, 0
    %12 = vsyncpa [#allocation6], 0
    %s13 = scalar_lea.sflag [#allocation6], 1
    %14 = vsyncpa %s13, 0
    loop: start=0, step=1, limit=5
    $region2: #{tpu_custom_call.1} parent=1 // loop_pre_header
      _
    $region3: #{tpu_custom_call.1} parent=1 // loop_header
      %s16 = sphi 0, %s20
      %p17 = scmp.ge.s32.totalorder %s16, 5
      %s23 = sphi 0, %s35
      %s24 = sphi 0, %s31
      %s25 = sphi 0, %s23
      %s26 = sphi 0, %s24
      %s27 = sphi 0, %s25
      %s28 = sphi 0, %s26
      %s40 = sphi 0, %s42
      %s43 = sphi 0, %s40
      %s44 = sphi 0, %s43
      %s60 = sphi 0, %s44
      %s64 = sphi 0, %s64
      %s66 = sphi 0, %s64
      %s67 = sphi 0, %s66
      %s81 = sphi 0, %s67
      %s85 = sphi 0, %s85
      %s87 = sphi 0, %s85
      %s88 = sphi 0, %s87
      %s102 = sphi 0, %s88
      %s106 = sphi 0, %s106
      %s108 = sphi 0, %s106
      %s109 = sphi 0, %s108
      %s123 = sphi 0, %s109
      %s131 = sphi 0, %s133
      %s134 = sphi 0, %s131
      %s135 = sphi 0, %s134
      %s151 = sphi 0, %s135
    $region4: #{tpu_custom_call.1} parent=1 // loop_header_branch
      %19 = sbr.rel (%p17) target = $region8
    $region5: #{tpu_custom_call.1} parent=1 // loop_body
      %s21 = ssub.s32 %s16, 1
      %s22 = ssub.s32 %s16, 2
      %s29 = sadd.s32 1, %s24
      %p30 = scmp.ge.s32.totalorder %s29, 3
      %s31 = scalar_select %p30, 0, %s29
      %s32 = sadd.s32 1, %s23
      %s33 = scalar_select %p30, %s32, %s23
      %p34 = scmp.ge.s32.totalorder %s33, 1
      %s35 = scalar_select %p34, 0, %s33
      %s36 = ssub.s32 %s24, %s31
      %s37 = ssub.s32 %s23, %s35
      %s38 = sor.u32 %s36, %s37
      %p39 = scmp.eq.s32.totalorder %s38, 0
      %s41 = sadd.s32 %s40, 1
      %s42 = scalar_select %p39, %s40, %s41
      %p45 = pneg %p39
      %p46 = scmp.eq.s32.totalorder %s16, 2
      %p47 = por %p45, %p46
      %p48 = scmp.ne.s32.totalorder %s40, %s43
      %p49 = scmp.eq.s32.totalorder %s16, 0
      %p50 = por %p48, %p49
      %p51 = scmp.ne.s32.totalorder %s40, %s43
      %p52 = scmp.eq.s32.totalorder %s21, 2
      %p53 = por %p51, %p52
      %p54 = scmp.ne.s32.totalorder %s43, %s44
      %p55 = scmp.eq.s32.totalorder %s21, 0
      %p56 = por %p54, %p55
      %p57 = scmp.ne.s32.totalorder %s43, %s44
      %p58 = scmp.eq.s32.totalorder %s22, 2
      %p59 = por %p57, %p58
      %p61 = scmp.ne.s32.totalorder %s44, %s60
      %p62 = scmp.eq.s32.totalorder %s22, 0
      %p63 = por %p61, %p62
      %s65 = sadd.s32 %s64, 1
      %p68 = scmp.eq.s32.totalorder %s16, 2
      %p69 = scmp.ne.s32.totalorder %s64, %s66
      %p70 = scmp.eq.s32.totalorder %s16, 0
      %p71 = por %p69, %p70
      %p72 = scmp.ne.s32.totalorder %s64, %s66
      %p73 = scmp.eq.s32.totalorder %s21, 2
      %p74 = por %p72, %p73
      %p75 = scmp.ne.s32.totalorder %s66, %s67
      %p76 = scmp.eq.s32.totalorder %s21, 0
      %p77 = por %p75, %p76
      %p78 = scmp.ne.s32.totalorder %s66, %s67
      %p79 = scmp.eq.s32.totalorder %s22, 2
      %p80 = por %p78, %p79
      %p82 = scmp.ne.s32.totalorder %s67, %s81
      %p83 = scmp.eq.s32.totalorder %s22, 0
      %p84 = por %p82, %p83
      %s86 = sadd.s32 %s85, 1
      %p89 = scmp.eq.s32.totalorder %s16, 2
      %p90 = scmp.ne.s32.totalorder %s85, %s87
      %p91 = scmp.eq.s32.totalorder %s16, 0
      %p92 = por %p90, %p91
      %p93 = scmp.ne.s32.totalorder %s85, %s87
      %p94 = scmp.eq.s32.totalorder %s21, 2
      %p95 = por %p93, %p94
      %p96 = scmp.ne.s32.totalorder %s87, %s88
      %p97 = scmp.eq.s32.totalorder %s21, 0
      %p98 = por %p96, %p97
      %p99 = scmp.ne.s32.totalorder %s87, %s88
      %p100 = scmp.eq.s32.totalorder %s22, 2
      %p101 = por %p99, %p100
      %p103 = scmp.ne.s32.totalorder %s88, %s102
      %p104 = scmp.eq.s32.totalorder %s22, 0
      %p105 = por %p103, %p104
      %s107 = sadd.s32 %s106, 1
      %p110 = scmp.eq.s32.totalorder %s16, 2
      %p111 = scmp.ne.s32.totalorder %s106, %s108
      %p112 = scmp.eq.s32.totalorder %s16, 0
      %p113 = por %p111, %p112
      %p114 = scmp.ne.s32.totalorder %s106, %s108
      %p115 = scmp.eq.s32.totalorder %s21, 2
      %p116 = por %p114, %p115
      %p117 = scmp.ne.s32.totalorder %s108, %s109
      %p118 = scmp.eq.s32.totalorder %s21, 0
      %p119 = por %p117, %p118
      %p120 = scmp.ne.s32.totalorder %s108, %s109
      %p121 = scmp.eq.s32.totalorder %s22, 2
      %p122 = por %p120, %p121
      %p124 = scmp.ne.s32.totalorder %s109, %s123
      %p125 = scmp.eq.s32.totalorder %s22, 0
      %p126 = por %p124, %p125
      %s127 = ssub.s32 %s24, %s31
      %s128 = ssub.s32 %s23, %s35
      %s129 = sor.u32 %s127, %s128
      %p130 = scmp.eq.s32.totalorder %s129, 0
      %s132 = sadd.s32 %s131, 1
      %s133 = scalar_select %p130, %s131, %s132
      %p136 = pneg %p130
      %p137 = scmp.eq.s32.totalorder %s16, 2
      %p138 = por %p136, %p137
      %p139 = scmp.ne.s32.totalorder %s131, %s134
      %p140 = scmp.eq.s32.totalorder %s16, 0
      %p141 = por %p139, %p140
      %p142 = scmp.ne.s32.totalorder %s131, %s134
      %p143 = scmp.eq.s32.totalorder %s21, 2
      %p144 = por %p142, %p143
      %p145 = scmp.ne.s32.totalorder %s134, %s135
      %p146 = scmp.eq.s32.totalorder %s21, 0
      %p147 = por %p145, %p146
      %p148 = scmp.ne.s32.totalorder %s134, %s135
      %p149 = scmp.eq.s32.totalorder %s22, 2
      %p150 = por %p148, %p149
      %p152 = scmp.ne.s32.totalorder %s135, %s151
      %p153 = scmp.eq.s32.totalorder %s22, 0
      %p154 = por %p152, %p153
      %p155 = scmp.le.s32.totalorder 1, %s16
      %p156 = scmp.lt.s32.totalorder %s16, 4
      %p157 = pnand %p155, %p156
      %p158 = pneg %p157
      // Predicated region
      $region9: #{tpu_custom_call.1} parent=5 // pred_check
        _
      $region10: #{tpu_custom_call.1} parent=5 // pred_check_branch
        %160 = sbr.rel (%p157) target = $region12
      $region11: #{tpu_custom_call.1} parent=5 // pred_region
        %s161 = ssub.s32 %s16, 1
        // Predicated region
        $region13: #{tpu_custom_call.1} parent=11 // pred_check
          %p162 = pneg %p77
        $region14: #{tpu_custom_call.1} parent=11 // pred_check_branch
          %164 = sbr.rel (%p162) target = $region16
        $region15: #{tpu_custom_call.1} parent=11 // pred_region
          _
        $region16: #{tpu_custom_call.1} parent=11 // pred_fallthru
          _
        // Predicated region
        $region17: #{tpu_custom_call.1} parent=11 // pred_check
          %p165 = pneg %p98
        $region18: #{tpu_custom_call.1} parent=11 // pred_check_branch
          %167 = sbr.rel (%p165) target = $region20
        $region19: #{tpu_custom_call.1} parent=11 // pred_region
          _
        $region20: #{tpu_custom_call.1} parent=11 // pred_fallthru
          _
        // Predicated region
        $region21: #{tpu_custom_call.1} parent=11 // pred_check
          %p168 = pneg %p119
        $region22: #{tpu_custom_call.1} parent=11 // pred_check_branch
          %170 = sbr.rel (%p168) target = $region24
        $region23: #{tpu_custom_call.1} parent=11 // pred_region
          _
        $region24: #{tpu_custom_call.1} parent=11 // pred_fallthru
          _
      $region12: #{tpu_custom_call.1} parent=5 // pred_fallthru
        _
      %p171 = scmp.lt.s32.totalorder %s16, 3
      // Predicated region
      $region25: #{tpu_custom_call.1} parent=5 // pred_check
        %p172 = pneg %p171
      $region26: #{tpu_custom_call.1} parent=5 // pred_check_branch
        %174 = sbr.rel (%p172) target = $region28
      $region27: #{tpu_custom_call.1} parent=5 // pred_region
        // Predicated region
        $region29: #{tpu_custom_call.1} parent=27 // pred_check
          %p175 = pneg %p50
        $region30: #{tpu_custom_call.1} parent=27 // pred_check_branch
          %177 = sbr.rel (%p175) target = $region32
        $region31: #{tpu_custom_call.1} parent=27 // pred_region
          %s178 = sand.u32 %s40, 1
          %s179 = scalar_lea.sflag [#allocation5], %s178
          %s180 = sand.u32 %s40, 1
          %s181 = smul.addr %s180, 384
          %s182 = scalar_lea.vmem [#allocation4], %s181
          %s183 = smul.u32 3, %s24
          %s185 = ssub.s32 6144, 6144
          %186 = vsyncadd %s179, %s185
          %s187 = smul.addr %s183, 16
          %s188 = sadd.s32 %s23, %s187
          %s189 = smul.addr %s188, 128
          %s190 = scalar_lea.hbm %s0, %s189
          %s191 = sshll.u32 %s182, 4
          %s192 = int_to_ptr.vmem [resolvable:$true] %s191
          %197 = dma.hbm_to_vmem [thread:$0]  %s190, 6144, %s192, %s179, 128, 128, 8
        $region32: #{tpu_custom_call.1} parent=27 // pred_fallthru
          _
      $region28: #{tpu_custom_call.1} parent=5 // pred_fallthru
        _
      %p198 = scmp.le.s32.totalorder 1, %s16
      %p199 = scmp.lt.s32.totalorder %s16, 4
      %p200 = pnand %p198, %p199
      %p201 = pneg %p200
      // Predicated region
      $region33: #{tpu_custom_call.1} parent=5 // pred_check
        _
      $region34: #{tpu_custom_call.1} parent=5 // pred_check_branch
        %203 = sbr.rel (%p200) target = $region36
      $region35: #{tpu_custom_call.1} parent=5 // pred_region
        %s204 = ssub.s32 %s16, 1
        %s205 = sand.u32 %s43, 1
        %s206 = scalar_lea.sflag [#allocation5], %s205
        %s207 = sand.u32 %s43, 1
        %s208 = smul.addr %s207, 384
        %s209 = scalar_lea.vmem [#allocation4], %s208
        // Predicated region
        $region37: #{tpu_custom_call.1} parent=35 // pred_check
          %p210 = pneg %p56
        $region38: #{tpu_custom_call.1} parent=35 // pred_check_branch
          %212 = sbr.rel (%p210) target = $region40
        $region39: #{tpu_custom_call.1} parent=35 // pred_region
          %213 = dma.done %s206, 6144
        $region40: #{tpu_custom_call.1} parent=35 // pred_fallthru
          _
        %s214 = sand.u32 %s43, 1
        %s215 = scalar_lea.sflag [#allocation5], %s214
        %s216 = sand.u32 %s43, 1
        %s217 = smul.addr %s216, 384
        %s218 = scalar_lea.vmem [#allocation4], %s217
        %p219 = pneg %p56
        %p220 = pneg %p53
        %p221 = pneg %p77
        %p222 = pneg %p74
        %p223 = pneg %p98
        %p224 = pneg %p95
        %p225 = pneg %p119
        %p226 = pneg %p116
        %p227 = pneg %p147
        %p228 = pneg %p144
        %s229 = sand.u32 %s134, 1
        %s230 = scalar_lea.sflag [#allocation6], %s229
        %s231 = sand.u32 %s134, 1
        %s232 = smul.addr %s231, 96
        %s233 = scalar_lea.vmem [#allocation7], %s232
        %s234 = smul.u32 3, %s26
        %s235 = smul.u32 3, %s26
        %p236 = scmp.eq.s32.totalorder %s26, 0
        // Predicated region
        $region41: #{tpu_custom_call.1} parent=35 // pred_check
          %p237 = pneg %p236
        $region42: #{tpu_custom_call.1} parent=35 // pred_check_branch
          %239 = sbr.rel (%p237) target = $region44
        $region43: #{tpu_custom_call.1} parent=35 // pred_region
          %240 = vst [vmem:[#allocation2] sm:$0xff] 0.0
          %241 = vst [vmem:[#allocation2 + $0x8] sm:$0xff] 0.0
          %242 = vst [vmem:[#allocation2 + $0x10] sm:$0xff] 0.0
          %243 = vst [vmem:[#allocation2 + $0x18] sm:$0xff] 0.0
          %244 = vst [vmem:[#allocation2 + $0x20] sm:$0xff] 0.0
          %245 = vst [vmem:[#allocation2 + $0x28] sm:$0xff] 0.0
          %246 = vst [vmem:[#allocation2 + $0x30] sm:$0xff] 0.0
          %247 = vst [vmem:[#allocation2 + $0x38] sm:$0xff] 0.0
          %248 = vst [vmem:[#allocation3] sm:$0xff] 0.0
          %249 = vst [vmem:[#allocation3 + $0x8] sm:$0xff] 0.0
          %250 = vst [vmem:[#allocation3 + $0x10] sm:$0xff] 0.0
          %251 = vst [vmem:[#allocation3 + $0x18] sm:$0xff] 0.0
          %252 = vst [vmem:[#allocation3 + $0x20] sm:$0xff] 0.0
          %253 = vst [vmem:[#allocation3 + $0x28] sm:$0xff] 0.0
          %254 = vst [vmem:[#allocation3 + $0x30] sm:$0xff] 0.0
          %255 = vst [vmem:[#allocation3 + $0x38] sm:$0xff] 0.0
        $region44: #{tpu_custom_call.1} parent=35 // pred_fallthru
          _
        %v256 = vld [vmem:[%s1] sm:$0xff]
        %v257 = vld [vmem:[%s1 + $0x8] sm:$0xff]
        %v258 = vld [vmem:[%s1 + $0x10] sm:$0xff]
        %v259 = vld [vmem:[%s1 + $0x18] sm:$0xff]
        %v260 = vld [vmem:[%s1 + $0x20] sm:$0xff]
        %v261 = vld [vmem:[%s1 + $0x28] sm:$0xff]
        %v262 = vld [vmem:[%s1 + $0x30] sm:$0xff]
        %v263 = vld [vmem:[%s1 + $0x38] sm:$0xff]
        %v264 = vld [vmem:[%s1 + $0x40] sm:$0xff]
        %v265 = vld [vmem:[%s1 + $0x48] sm:$0xff]
        %v266 = vld [vmem:[%s1 + $0x50] sm:$0xff]
        %v267 = vld [vmem:[%s1 + $0x58] sm:$0xff]
        %v268 = vld [vmem:[%s1 + $0x60] sm:$0xff]
        %v269 = vld [vmem:[%s1 + $0x68] sm:$0xff]
        %v270 = vld [vmem:[%s1 + $0x70] sm:$0xff]
        %v271 = vld [vmem:[%s1 + $0x78] sm:$0xff]
        %v272 = vld [vmem:[%s2] sm:$0xff]
        %v273 = vld [vmem:[%s2 + $0x8] sm:$0xff]
        %v274 = vld [vmem:[%s2 + $0x10] sm:$0xff]
        %v275 = vld [vmem:[%s2 + $0x18] sm:$0xff]
        %v276 = vld [vmem:[%s2 + $0x20] sm:$0xff]
        %v277 = vld [vmem:[%s2 + $0x28] sm:$0xff]
        %v278 = vld [vmem:[%s2 + $0x30] sm:$0xff]
        %v279 = vld [vmem:[%s2 + $0x38] sm:$0xff]
        %v280 = vld [vmem:[%s2 + $0x40] sm:$0xff]
        %v281 = vld [vmem:[%s2 + $0x48] sm:$0xff]
        %v282 = vld [vmem:[%s2 + $0x50] sm:$0xff]
        %v283 = vld [vmem:[%s2 + $0x58] sm:$0xff]
        %v284 = vld [vmem:[%s2 + $0x60] sm:$0xff]
        %v285 = vld [vmem:[%s2 + $0x68] sm:$0xff]
        %v286 = vld [vmem:[%s2 + $0x70] sm:$0xff]
        %v287 = vld [vmem:[%s2 + $0x78] sm:$0xff]
        %v288 = vld [vmem:[%s3] sm:$0xff]
        %v289 = vld [vmem:[%s3 + $0x8] sm:$0xff]
        %v290 = vld [vmem:[%s3 + $0x10] sm:$0xff]
        %v291 = vld [vmem:[%s3 + $0x18] sm:$0xff]
        %v292 = vld [vmem:[%s3 + $0x20] sm:$0xff]
        %v293 = vld [vmem:[%s3 + $0x28] sm:$0xff]
        %v294 = vld [vmem:[%s3 + $0x30] sm:$0xff]
        %v295 = vld [vmem:[%s3 + $0x38] sm:$0xff]
        %v296 = vld [vmem:[%s3 + $0x40] sm:$0xff]
        %v297 = vld [vmem:[%s3 + $0x48] sm:$0xff]
        %v298 = vld [vmem:[%s3 + $0x50] sm:$0xff]
        %v299 = vld [vmem:[%s3 + $0x58] sm:$0xff]
        %v300 = vld [vmem:[%s3 + $0x60] sm:$0xff]
        %v301 = vld [vmem:[%s3 + $0x68] sm:$0xff]
        %v302 = vld [vmem:[%s3 + $0x70] sm:$0xff]
        %v303 = vld [vmem:[%s3 + $0x78] sm:$0xff]
        %305 = vset.pattern.permute.xlu0 0
        %306 = vperm.xlu0 %305, %v288
        %v307 = vpop.permute.xlu0 %306
        %310 = vset.pattern.permute.xlu0 0
        %311 = vperm.xlu0 %310, %v289
        %v312 = vpop.permute.xlu0 %311
        %315 = vset.pattern.permute.xlu0 0
        %316 = vperm.xlu0 %315, %v290
        %v317 = vpop.permute.xlu0 %316
        %320 = vset.pattern.permute.xlu0 0
        %321 = vperm.xlu0 %320, %v291
        %v322 = vpop.permute.xlu0 %321
        %325 = vset.pattern.permute.xlu0 0
        %326 = vperm.xlu0 %325, %v292
        %v327 = vpop.permute.xlu0 %326
        %330 = vset.pattern.permute.xlu0 0
        %331 = vperm.xlu0 %330, %v293
        %v332 = vpop.permute.xlu0 %331
        %335 = vset.pattern.permute.xlu0 0
        %336 = vperm.xlu0 %335, %v294
        %v337 = vpop.permute.xlu0 %336
        %340 = vset.pattern.permute.xlu0 0
        %341 = vperm.xlu0 %340, %v295
        %v342 = vpop.permute.xlu0 %341
        %345 = vset.pattern.permute.xlu0 0
        %346 = vperm.xlu0 %345, %v296
        %v347 = vpop.permute.xlu0 %346
        %350 = vset.pattern.permute.xlu0 0
        %351 = vperm.xlu0 %350, %v297
        %v352 = vpop.permute.xlu0 %351
        %355 = vset.pattern.permute.xlu0 0
        %356 = vperm.xlu0 %355, %v298
        %v357 = vpop.permute.xlu0 %356
        %360 = vset.pattern.permute.xlu0 0
        %361 = vperm.xlu0 %360, %v299
        %v362 = vpop.permute.xlu0 %361
        %365 = vset.pattern.permute.xlu0 0
        %366 = vperm.xlu0 %365, %v300
        %v367 = vpop.permute.xlu0 %366
        %370 = vset.pattern.permute.xlu0 0
        %371 = vperm.xlu0 %370, %v301
        %v372 = vpop.permute.xlu0 %371
        %375 = vset.pattern.permute.xlu0 0
        %376 = vperm.xlu0 %375, %v302
        %v377 = vpop.permute.xlu0 %376
        %380 = vset.pattern.permute.xlu0 0
        %381 = vperm.xlu0 %380, %v303
        %v382 = vpop.permute.xlu0 %381
        %v384 = vld [vmem:[#allocation2] sm:$0xff]
        %v385 = vld [vmem:[#allocation2 + $0x8] sm:$0xff]
        %v386 = vld [vmem:[#allocation2 + $0x10] sm:$0xff]
        %v387 = vld [vmem:[#allocation2 + $0x18] sm:$0xff]
        %s388 = scalar_lea.vmem [#allocation2], 32
        %v389 = vld [vmem:[%s388] sm:$0xff]
        %v390 = vld [vmem:[%s388 + $0x8] sm:$0xff]
        %v391 = vld [vmem:[%s388 + $0x10] sm:$0xff]
        %v392 = vld [vmem:[%s388 + $0x18] sm:$0xff]
        %v393 = vld [vmem:[#allocation3] sm:$0xff]
        %v394 = vld [vmem:[#allocation3 + $0x8] sm:$0xff]
        %v395 = vld [vmem:[#allocation3 + $0x10] sm:$0xff]
        %v396 = vld [vmem:[#allocation3 + $0x18] sm:$0xff]
        %s397 = scalar_lea.vmem [#allocation3], 32
        %v398 = vld [vmem:[%s397] sm:$0xff]
        %v399 = vld [vmem:[%s397 + $0x8] sm:$0xff]
        %v400 = vld [vmem:[%s397 + $0x10] sm:$0xff]
        %v401 = vld [vmem:[%s397 + $0x18] sm:$0xff]
        %v402 = vld [vmem:[%s209] sm:$0xff]
        %v403 = vld [vmem:[%s209 + $0x8] sm:$0xff]
        %v404 = vld [vmem:[%s209 + $0x10] sm:$0xff]
        %v405 = vld [vmem:[%s209 + $0x18] sm:$0xff]
        %v406 = vld [vmem:[%s209 + $0x20] sm:$0xff]
        %v407 = vld [vmem:[%s209 + $0x28] sm:$0xff]
        %v408 = vld [vmem:[%s209 + $0x30] sm:$0xff]
        %v409 = vld [vmem:[%s209 + $0x38] sm:$0xff]
        %v410 = vld [vmem:[%s209 + $0x40] sm:$0xff]
        %v411 = vld [vmem:[%s209 + $0x48] sm:$0xff]
        %v412 = vld [vmem:[%s209 + $0x50] sm:$0xff]
        %v413 = vld [vmem:[%s209 + $0x58] sm:$0xff]
        %v414 = vld [vmem:[%s209 + $0x60] sm:$0xff]
        %v415 = vld [vmem:[%s209 + $0x68] sm:$0xff]
        %v416 = vld [vmem:[%s209 + $0x70] sm:$0xff]
        %v417 = vld [vmem:[%s209 + $0x78] sm:$0xff]
        %vm418 = vcmask 261120
        %v420 = vsel %vm418, %v256, 0
        %v423 = vsel %vm418, %v257, 0
        %v426 = vsel %vm418, %v258, 0
        %v429 = vsel %vm418, %v259, 0
        %v432 = vsel %vm418, %v260, 0
        %v435 = vsel %vm418, %v261, 0
        %v438 = vsel %vm418, %v262, 0
        %v441 = vsel %vm418, %v263, 0
        %v444 = vsel %vm418, %v264, 0
        %v447 = vsel %vm418, %v265, 0
        %v450 = vsel %vm418, %v266, 0
        %v453 = vsel %vm418, %v267, 0
        %v456 = vsel %vm418, %v268, 0
        %v459 = vsel %vm418, %v269, 0
        %v462 = vsel %vm418, %v270, 0
        %v465 = vsel %vm418, %v271, 0
        %467 = vmatprep.subr.mxu0 0.0
        %468 = vmatpush1.msra.mxu0 %v384
        %469 = vmatprep.subr.mxu0 0.0
        %470 = vmatpush1.msra.mxu0 %v385
        %471 = vmatprep.subr.mxu0 0.0
        %472 = vmatpush1.msra.mxu0 %v386
        %473 = vmatprep.subr.mxu0 0.0
        %474 = vmatpush1.msra.mxu0 %v387
        %475 = vmatprep.subr.mxu0 0.0
        %476 = vmatpush1.msra.mxu0 0.0
        %477 = vmatprep.subr.mxu0 0.0
        %478 = vmatpush1.msra.mxu0 0.0
        %479 = vmatprep.subr.mxu0 0.0
        %480 = vmatpush1.msra.mxu0 0.0
        %481 = vmatprep.subr.mxu0 0.0
        %482 = vmatpush1.msra.mxu0 0.0
        %483 = vmatprep.subr.mxu0 0.0
        %484 = vmatpush1.msra.mxu0 0.0
        %485 = vmatprep.subr.mxu0 0.0
        %486 = vmatpush1.msra.mxu0 0.0
        %487 = vmatprep.subr.mxu0 0.0
        %488 = vmatpush1.msra.mxu0 0.0
        %489 = vmatprep.subr.mxu0 0.0
        %490 = vmatpush1.msra.mxu0 0.0
        %491 = vmatprep.subr.mxu0 0.0
        %492 = vmatpush1.msra.mxu0 0.0
        %493 = vmatprep.subr.mxu0 0.0
        %494 = vmatpush1.msra.mxu0 0.0
        %495 = vmatprep.subr.mxu0 0.0
        %496 = vmatpush1.msra.mxu0 0.0
        %497 = vmatprep.subr.mxu0 0.0
        %498 = vmatpush1.msra.mxu0 0.0
        %499 = vmatprep.subr.mxu0 0.0
        %500 = vmatpush1.msra.mxu0 0.0
        %501 = vmatprep.subr.mxu0 0.0
        %502 = vmatpush1.msra.mxu0 0.0
        %503 = vmatprep.subr.mxu0 0.0
        %504 = vmatpush1.msra.mxu0 0.0
        %505 = vmatprep.subr.mxu0 0.0
        %506 = vmatpush1.msra.mxu0 0.0
        %507 = vmatprep.subr.mxu0 0.0
        %508 = vmatpush1.msra.mxu0 0.0
        %509 = vmatprep.subr.mxu0 0.0
        %510 = vmatpush1.msra.mxu0 0.0
        %511 = vmatprep.subr.mxu0 0.0
        %512 = vmatpush1.msra.mxu0 0.0
        %513 = vmatprep.subr.mxu0 0.0
        %514 = vmatpush1.msra.mxu0 0.0
        %515 = vmatprep.subr.mxu0 0.0
        %516 = vmatpush1.msra.mxu0 0.0
        %517 = vmatprep.subr.mxu0 0.0
        %518 = vmatpush1.msra.mxu0 0.0
        %519 = vmatprep.subr.mxu0 0.0
        %520 = vmatpush1.msra.mxu0 0.0
        %521 = vmatprep.subr.mxu0 0.0
        %522 = vmatpush1.msra.mxu0 0.0
        %523 = vmatprep.subr.mxu0 0.0
        %524 = vmatpush1.msra.mxu0 0.0
        %525 = vmatprep.subr.mxu0 0.0
        %526 = vmatpush1.msra.mxu0 0.0
        %527 = vmatprep.subr.mxu0 0.0
        %528 = vmatpush1.msra.mxu0 0.0
        %529 = vmatprep.subr.mxu0 0.0
        %530 = vmatpush1.msra.mxu0 0.0
        %531 = vmatprep.mubr.f32.mxu0 0.0
        %532 = vmatmul.mubr.f32.gmra.mrb[0].mxu0 %v420
        %v533 = vpop.f32.mrb[0].mxu0
        %v534 = vadd.f32 0.0, %v533
        %v535 = vpop.f32.mrb[0].mxu0
        %536 = vmatprep.mubr.f32.mxu0 0.0
        %537 = vmatmul.mubr.f32.gmra.mrb[0].mxu0 %v423
        %v538 = vpop.f32.mrb[0].mxu0
        %v539 = vadd.f32 0.0, %v538
        %v540 = vpop.f32.mrb[0].mxu0
        %541 = vmatprep.mubr.f32.mxu0 0.0
        %542 = vmatmul.mubr.f32.gmra.mrb[0].mxu0 %v426
        %v543 = vpop.f32.mrb[0].mxu0
        %v544 = vadd.f32 0.0, %v543
        %v545 = vpop.f32.mrb[0].mxu0
        %546 = vmatprep.mubr.f32.mxu0 0.0
        %547 = vmatmul.mubr.f32.gmra.mrb[0].mxu0 %v429
        %v548 = vpop.f32.mrb[0].mxu0
        %v549 = vadd.f32 0.0, %v548
        %v550 = vpop.f32.mrb[0].mxu0
        %551 = vmatprep.mubr.f32.mxu0 0.0
        %552 = vmatmul.mubr.f32.gmra.mrb[0].mxu0 %v432
        %v553 = vpop.f32.mrb[0].mxu0
        %v554 = vadd.f32 0.0, %v553
        %v555 = vpop.f32.mrb[0].mxu0
        %556 = vmatprep.mubr.f32.mxu0 0.0
        %557 = vmatmul.mubr.f32.gmra.mrb[0].mxu0 %v435
        %v558 = vpop.f32.mrb[0].mxu0
        %v559 = vadd.f32 0.0, %v558
        %v560 = vpop.f32.mrb[0].mxu0
        %561 = vmatprep.mubr.f32.mxu0 0.0
        %562 = vmatmul.mubr.f32.gmra.mrb[0].mxu0 %v438
        %v563 = vpop.f32.mrb[0].mxu0
        %v564 = vadd.f32 0.0, %v563
        %v565 = vpop.f32.mrb[0].mxu0
        %566 = vmatprep.mubr.f32.mxu0 0.0
        %567 = vmatmul.mubr.f32.gmra.mrb[0].mxu0 %v441
        %v568 = vpop.f32.mrb[0].mxu0
        %v569 = vadd.f32 0.0, %v568
        %v570 = vpop.f32.mrb[0].mxu0
        %571 = vmatprep.mubr.f32.mxu0 0.0
        %572 = vmatmul.mubr.f32.gmra.mrb[0].mxu0 %v444
        %v573 = vpop.f32.mrb[0].mxu0
        %v574 = vadd.f32 0.0, %v573
        %v575 = vpop.f32.mrb[0].mxu0
        %576 = vmatprep.mubr.f32.mxu0 0.0
        %577 = vmatmul.mubr.f32.gmra.mrb[0].mxu0 %v447
        %v578 = vpop.f32.mrb[0].mxu0
        %v579 = vadd.f32 0.0, %v578
        %v580 = vpop.f32.mrb[0].mxu0
        %581 = vmatprep.mubr.f32.mxu0 0.0
        %582 = vmatmul.mubr.f32.gmra.mrb[0].mxu0 %v450
        %v583 = vpop.f32.mrb[0].mxu0
        %v584 = vadd.f32 0.0, %v583
        %v585 = vpop.f32.mrb[0].mxu0
        %586 = vmatprep.mubr.f32.mxu0 0.0
        %587 = vmatmul.mubr.f32.gmra.mrb[0].mxu0 %v453
        %v588 = vpop.f32.mrb[0].mxu0
        %v589 = vadd.f32 0.0, %v588
        %v590 = vpop.f32.mrb[0].mxu0
        %591 = vmatprep.mubr.f32.mxu0 0.0
        %592 = vmatmul.mubr.f32.gmra.mrb[0].mxu0 %v456
        %v593 = vpop.f32.mrb[0].mxu0
        %v594 = vadd.f32 0.0, %v593
        %v595 = vpop.f32.mrb[0].mxu0
        %596 = vmatprep.mubr.f32.mxu0 0.0
        %597 = vmatmul.mubr.f32.gmra.mrb[0].mxu0 %v459
        %v598 = vpop.f32.mrb[0].mxu0
        %v599 = vadd.f32 0.0, %v598
        %v600 = vpop.f32.mrb[0].mxu0
        %601 = vmatprep.mubr.f32.mxu0 0.0
        %602 = vmatmul.mubr.f32.gmra.mrb[0].mxu0 %v462
        %v603 = vpop.f32.mrb[0].mxu0
        %v604 = vadd.f32 0.0, %v603
        %v605 = vpop.f32.mrb[0].mxu0
        %606 = vmatprep.mubr.f32.mxu0 0.0
        %607 = vmatmul.mubr.f32.gmra.mrb[0].mxu0 %v465
        %v608 = vpop.f32.mrb[0].mxu0
        %v609 = vadd.f32 0.0, %v608
        %v610 = vpop.f32.mrb[0].mxu0
        %611 = vdwg.mxu0
        %v612 = vadd.f32 %v402, %v534
        %v613 = vadd.f32 %v403, %v539
        %v614 = vadd.f32 %v404, %v544
        %v615 = vadd.f32 %v405, %v549
        %v616 = vadd.f32 %v406, %v554
        %v617 = vadd.f32 %v407, %v559
        %v618 = vadd.f32 %v408, %v564
        %v619 = vadd.f32 %v409, %v569
        %v620 = vadd.f32 %v410, %v574
        %v621 = vadd.f32 %v411, %v579
        %v622 = vadd.f32 %v412, %v584
        %v623 = vadd.f32 %v413, %v589
        %v624 = vadd.f32 %v414, %v594
        %v625 = vadd.f32 %v415, %v599
        %v626 = vadd.f32 %v416, %v604
        %v627 = vadd.f32 %v417, %v609
        %v628 = vxor.u32 %v612, 2147483648
        %v629 = vxor.u32 %v613, 2147483648
        %v630 = vxor.u32 %v614, 2147483648
        %v631 = vxor.u32 %v615, 2147483648
        %v632 = vmul.f32 %v628, 1.442695
        %v633 = vpow.pop %v632
        %v634 = vmul.f32 %v629, 1.442695
        %v635 = vpow.pop %v634
        %v636 = vmul.f32 %v630, 1.442695
        %v637 = vpow.pop %v636
        %v638 = vmul.f32 %v631, 1.442695
        %v639 = vpow.pop %v638
        %v640 = vadd.f32 %v633, 1.0
        %v641 = vadd.f32 %v635, 1.0
        %v642 = vadd.f32 %v637, 1.0
        %v643 = vadd.f32 %v639, 1.0
        %v644 = vrcp.pop %v640
        %v645 = vmul.f32 1.0, %v644
        %v646 = vrcp.pop %v641
        %v647 = vmul.f32 1.0, %v646
        %v648 = vrcp.pop %v642
        %v649 = vmul.f32 1.0, %v648
        %v650 = vrcp.pop %v643
        %v651 = vmul.f32 1.0, %v650
        %v652 = vxor.u32 %v616, 2147483648
        %v653 = vxor.u32 %v617, 2147483648
        %v654 = vxor.u32 %v618, 2147483648
        %v655 = vxor.u32 %v619, 2147483648
        %v656 = vmul.f32 %v652, 1.442695
        %v657 = vpow.pop %v656
        %v658 = vmul.f32 %v653, 1.442695
        %v659 = vpow.pop %v658
        %v660 = vmul.f32 %v654, 1.442695
        %v661 = vpow.pop %v660
        %v662 = vmul.f32 %v655, 1.442695
        %v663 = vpow.pop %v662
        %v664 = vadd.f32 %v657, 1.0
        %v665 = vadd.f32 %v659, 1.0
        %v666 = vadd.f32 %v661, 1.0
        %v667 = vadd.f32 %v663, 1.0
        %v668 = vrcp.pop %v664
        %v669 = vmul.f32 1.0, %v668
        %v670 = vrcp.pop %v665
        %v671 = vmul.f32 1.0, %v670
        %v672 = vrcp.pop %v666
        %v673 = vmul.f32 1.0, %v672
        %v674 = vrcp.pop %v667
        %v675 = vmul.f32 1.0, %v674
        %v676 = vtanh.pop %v620
        %v677 = vtanh.pop %v621
        %v678 = vtanh.pop %v622
        %v679 = vtanh.pop %v623
        %v680 = vxor.u32 %v624, 2147483648
        %v681 = vxor.u32 %v625, 2147483648
        %v682 = vxor.u32 %v626, 2147483648
        %v683 = vxor.u32 %v627, 2147483648
        %v684 = vmul.f32 %v680, 1.442695
        %v685 = vpow.pop %v684
        %v686 = vmul.f32 %v681, 1.442695
        %v687 = vpow.pop %v686
        %v688 = vmul.f32 %v682, 1.442695
        %v689 = vpow.pop %v688
        %v690 = vmul.f32 %v683, 1.442695
        %v691 = vpow.pop %v690
        %v692 = vadd.f32 %v685, 1.0
        %v693 = vadd.f32 %v687, 1.0
        %v694 = vadd.f32 %v689, 1.0
        %v695 = vadd.f32 %v691, 1.0
        %v696 = vrcp.pop %v692
        %v697 = vmul.f32 1.0, %v696
        %v698 = vrcp.pop %v693
        %v699 = vmul.f32 1.0, %v698
        %v700 = vrcp.pop %v694
        %v701 = vmul.f32 1.0, %v700
        %v702 = vrcp.pop %v695
        %v703 = vmul.f32 1.0, %v702
        %v704 = vmul.f32 %v669, %v393
        %v705 = vmul.f32 %v671, %v394
        %v706 = vmul.f32 %v673, %v395
        %v707 = vmul.f32 %v675, %v396
        %v708 = vmul.f32 %v645, %v676
        %v709 = vmul.f32 %v647, %v677
        %v710 = vmul.f32 %v649, %v678
        %v711 = vmul.f32 %v651, %v679
        %v712 = vadd.f32 %v704, %v708
        %v713 = vadd.f32 %v705, %v709
        %v714 = vadd.f32 %v706, %v710
        %v715 = vadd.f32 %v707, %v711
        %v716 = vtanh.pop %v712
        %v717 = vtanh.pop %v713
        %v718 = vtanh.pop %v714
        %v719 = vtanh.pop %v715
        %v720 = vmul.f32 %v697, %v716
        %v721 = vmul.f32 %v699, %v717
        %v722 = vmul.f32 %v701, %v718
        %v723 = vmul.f32 %v703, %v719
        %vm724 = vcmask 523264
        %v726 = vsel %vm724, %v272, 0
        %v729 = vsel %vm724, %v273, 0
        %v732 = vsel %vm724, %v274, 0
        %v735 = vsel %vm724, %v275, 0
        %v738 = vsel %vm724, %v276, 0
        %v741 = vsel %vm724, %v277, 0
        %v744 = vsel %vm724, %v278, 0
        %v747 = vsel %vm724, %v279, 0
        %v750 = vsel %vm724, %v280, 0
        %v753 = vsel %vm724, %v281, 0
        %v756 = vsel %vm724, %v282, 0
        %v759 = vsel %vm724, %v283, 0
        %v762 = vsel %vm724, %v284, 0
        %v765 = vsel %vm724, %v285, 0
        %v768 = vsel %vm724, %v286, 0
        %v771 = vsel %vm724, %v287, 0
        %773 = vmatprep.subr.mxu0 0.0
        %774 = vmatpush1.msra.mxu0 %v720
        %775 = vmatprep.subr.mxu0 0.0
        %776 = vmatpush1.msra.mxu0 %v721
        %777 = vmatprep.subr.mxu0 0.0
        %778 = vmatpush1.msra.mxu0 %v722
        %779 = vmatprep.subr.mxu0 0.0
        %780 = vmatpush1.msra.mxu0 %v723
        %781 = vmatprep.subr.mxu0 0.0
        %782 = vmatpush1.msra.mxu0 %v389
        %783 = vmatprep.subr.mxu0 0.0
        %784 = vmatpush1.msra.mxu0 %v390
        %785 = vmatprep.subr.mxu0 0.0
        %786 = vmatpush1.msra.mxu0 %v391
        %787 = vmatprep.subr.mxu0 0.0
        %788 = vmatpush1.msra.mxu0 %v392
        %789 = vmatprep.subr.mxu0 0.0
        %790 = vmatpush1.msra.mxu0 0.0
        %791 = vmatprep.subr.mxu0 0.0
        %792 = vmatpush1.msra.mxu0 0.0
        %793 = vmatprep.subr.mxu0 0.0
        %794 = vmatpush1.msra.mxu0 0.0
        %795 = vmatprep.subr.mxu0 0.0
        %796 = vmatpush1.msra.mxu0 0.0
        %797 = vmatprep.subr.mxu0 0.0
        %798 = vmatpush1.msra.mxu0 0.0
        %799 = vmatprep.subr.mxu0 0.0
        %800 = vmatpush1.msra.mxu0 0.0
        %801 = vmatprep.subr.mxu0 0.0
        %802 = vmatpush1.msra.mxu0 0.0
        %803 = vmatprep.subr.mxu0 0.0
        %804 = vmatpush1.msra.mxu0 0.0
        %805 = vmatprep.subr.mxu0 0.0
        %806 = vmatpush1.msra.mxu0 0.0
        %807 = vmatprep.subr.mxu0 0.0
        %808 = vmatpush1.msra.mxu0 0.0
        %809 = vmatprep.subr.mxu0 0.0
        %810 = vmatpush1.msra.mxu0 0.0
        %811 = vmatprep.subr.mxu0 0.0
        %812 = vmatpush1.msra.mxu0 0.0
        %813 = vmatprep.subr.mxu0 0.0
        %814 = vmatpush1.msra.mxu0 0.0
        %815 = vmatprep.subr.mxu0 0.0
        %816 = vmatpush1.msra.mxu0 0.0
        %817 = vmatprep.subr.mxu0 0.0
        %818 = vmatpush1.msra.mxu0 0.0
        %819 = vmatprep.subr.mxu0 0.0
        %820 = vmatpush1.msra.mxu0 0.0
        %821 = vmatprep.subr.mxu0 0.0
        %822 = vmatpush1.msra.mxu0 0.0
        %823 = vmatprep.subr.mxu0 0.0
        %824 = vmatpush1.msra.mxu0 0.0
        %825 = vmatprep.subr.mxu0 0.0
        %826 = vmatpush1.msra.mxu0 0.0
        %827 = vmatprep.subr.mxu0 0.0
        %828 = vmatpush1.msra.mxu0 0.0
        %829 = vmatprep.subr.mxu0 0.0
        %830 = vmatpush1.msra.mxu0 0.0
        %831 = vmatprep.subr.mxu0 0.0
        %832 = vmatpush1.msra.mxu0 0.0
        %833 = vmatprep.subr.mxu0 0.0
        %834 = vmatpush1.msra.mxu0 0.0
        %835 = vmatprep.subr.mxu0 0.0
        %836 = vmatpush1.msra.mxu0 0.0
        %837 = vmatprep.mubr.f32.mxu0 0.0
        %838 = vmatmul.mubr.f32.gmra.mrb[0].mxu0 %v726
        %v839 = vpop.f32.mrb[0].mxu0
        %v840 = vadd.f32 %v307, %v839
        %v841 = vpop.f32.mrb[0].mxu0
        %842 = vmatprep.mubr.f32.mxu0 0.0
        %843 = vmatmul.mubr.f32.gmra.mrb[0].mxu0 %v729
        %v844 = vpop.f32.mrb[0].mxu0
        %v845 = vadd.f32 %v312, %v844
        %v846 = vpop.f32.mrb[0].mxu0
        %847 = vmatprep.mubr.f32.mxu0 0.0
        %848 = vmatmul.mubr.f32.gmra.mrb[0].mxu0 %v732
        %v849 = vpop.f32.mrb[0].mxu0
        %v850 = vadd.f32 %v317, %v849
        %v851 = vpop.f32.mrb[0].mxu0
        %852 = vmatprep.mubr.f32.mxu0 0.0
        %853 = vmatmul.mubr.f32.gmra.mrb[0].mxu0 %v735
        %v854 = vpop.f32.mrb[0].mxu0
        %v855 = vadd.f32 %v322, %v854
        %v856 = vpop.f32.mrb[0].mxu0
        %857 = vmatprep.mubr.f32.mxu0 0.0
        %858 = vmatmul.mubr.f32.gmra.mrb[0].mxu0 %v738
        %v859 = vpop.f32.mrb[0].mxu0
        %v860 = vadd.f32 %v327, %v859
        %v861 = vpop.f32.mrb[0].mxu0
        %862 = vmatprep.mubr.f32.mxu0 0.0
        %863 = vmatmul.mubr.f32.gmra.mrb[0].mxu0 %v741
        %v864 = vpop.f32.mrb[0].mxu0
        %v865 = vadd.f32 %v332, %v864
        %v866 = vpop.f32.mrb[0].mxu0
        %867 = vmatprep.mubr.f32.mxu0 0.0
        %868 = vmatmul.mubr.f32.gmra.mrb[0].mxu0 %v744
        %v869 = vpop.f32.mrb[0].mxu0
        %v870 = vadd.f32 %v337, %v869
        %v871 = vpop.f32.mrb[0].mxu0
        %872 = vmatprep.mubr.f32.mxu0 0.0
        %873 = vmatmul.mubr.f32.gmra.mrb[0].mxu0 %v747
        %v874 = vpop.f32.mrb[0].mxu0
        %v875 = vadd.f32 %v342, %v874
        %v876 = vpop.f32.mrb[0].mxu0
        %877 = vmatprep.mubr.f32.mxu0 0.0
        %878 = vmatmul.mubr.f32.gmra.mrb[0].mxu0 %v750
        %v879 = vpop.f32.mrb[0].mxu0
        %v880 = vadd.f32 %v347, %v879
        %v881 = vpop.f32.mrb[0].mxu0
        %882 = vmatprep.mubr.f32.mxu0 0.0
        %883 = vmatmul.mubr.f32.gmra.mrb[0].mxu0 %v753
        %v884 = vpop.f32.mrb[0].mxu0
        %v885 = vadd.f32 %v352, %v884
        %v886 = vpop.f32.mrb[0].mxu0
        %887 = vmatprep.mubr.f32.mxu0 0.0
        %888 = vmatmul.mubr.f32.gmra.mrb[0].mxu0 %v756
        %v889 = vpop.f32.mrb[0].mxu0
        %v890 = vadd.f32 %v357, %v889
        %v891 = vpop.f32.mrb[0].mxu0
        %892 = vmatprep.mubr.f32.mxu0 0.0
        %893 = vmatmul.mubr.f32.gmra.mrb[0].mxu0 %v759
        %v894 = vpop.f32.mrb[0].mxu0
        %v895 = vadd.f32 %v362, %v894
        %v896 = vpop.f32.mrb[0].mxu0
        %897 = vmatprep.mubr.f32.mxu0 0.0
        %898 = vmatmul.mubr.f32.gmra.mrb[0].mxu0 %v762
        %v899 = vpop.f32.mrb[0].mxu0
        %v900 = vadd.f32 %v367, %v899
        %v901 = vpop.f32.mrb[0].mxu0
        %902 = vmatprep.mubr.f32.mxu0 0.0
        %903 = vmatmul.mubr.f32.gmra.mrb[0].mxu0 %v765
        %v904 = vpop.f32.mrb[0].mxu0
        %v905 = vadd.f32 %v372, %v904
        %v906 = vpop.f32.mrb[0].mxu0
        %907 = vmatprep.mubr.f32.mxu0 0.0
        %908 = vmatmul.mubr.f32.gmra.mrb[0].mxu0 %v768
        %v909 = vpop.f32.mrb[0].mxu0
        %v910 = vadd.f32 %v377, %v909
        %v911 = vpop.f32.mrb[0].mxu0
        %912 = vmatprep.mubr.f32.mxu0 0.0
        %913 = vmatmul.mubr.f32.gmra.mrb[0].mxu0 %v771
        %v914 = vpop.f32.mrb[0].mxu0
        %v915 = vadd.f32 %v382, %v914
        %v916 = vpop.f32.mrb[0].mxu0
        %917 = vdwg.mxu0
        %v918 = vxor.u32 %v840, 2147483648
        %v919 = vxor.u32 %v845, 2147483648
        %v920 = vxor.u32 %v850, 2147483648
        %v921 = vxor.u32 %v855, 2147483648
        %v922 = vmul.f32 %v918, 1.442695
        %v923 = vpow.pop %v922
        %v924 = vmul.f32 %v919, 1.442695
        %v925 = vpow.pop %v924
        %v926 = vmul.f32 %v920, 1.442695
        %v927 = vpow.pop %v926
        %v928 = vmul.f32 %v921, 1.442695
        %v929 = vpow.pop %v928
        %v930 = vadd.f32 %v923, 1.0
        %v931 = vadd.f32 %v925, 1.0
        %v932 = vadd.f32 %v927, 1.0
        %v933 = vadd.f32 %v929, 1.0
        %v934 = vrcp.pop %v930
        %v935 = vmul.f32 1.0, %v934
        %v936 = vrcp.pop %v931
        %v937 = vmul.f32 1.0, %v936
        %v938 = vrcp.pop %v932
        %v939 = vmul.f32 1.0, %v938
        %v940 = vrcp.pop %v933
        %v941 = vmul.f32 1.0, %v940
        %v942 = vxor.u32 %v860, 2147483648
        %v943 = vxor.u32 %v865, 2147483648
        %v944 = vxor.u32 %v870, 2147483648
        %v945 = vxor.u32 %v875, 2147483648
        %v946 = vmul.f32 %v942, 1.442695
        %v947 = vpow.pop %v946
        %v948 = vmul.f32 %v943, 1.442695
        %v949 = vpow.pop %v948
        %v950 = vmul.f32 %v944, 1.442695
        %v951 = vpow.pop %v950
        %v952 = vmul.f32 %v945, 1.442695
        %v953 = vpow.pop %v952
        %v954 = vadd.f32 %v947, 1.0
        %v955 = vadd.f32 %v949, 1.0
        %v956 = vadd.f32 %v951, 1.0
        %v957 = vadd.f32 %v953, 1.0
        %v958 = vrcp.pop %v954
        %v959 = vmul.f32 1.0, %v958
        %v960 = vrcp.pop %v955
        %v961 = vmul.f32 1.0, %v960
        %v962 = vrcp.pop %v956
        %v963 = vmul.f32 1.0, %v962
        %v964 = vrcp.pop %v957
        %v965 = vmul.f32 1.0, %v964
        %v966 = vtanh.pop %v880
        %v967 = vtanh.pop %v885
        %v968 = vtanh.pop %v890
        %v969 = vtanh.pop %v895
        %v970 = vxor.u32 %v900, 2147483648
        %v971 = vxor.u32 %v905, 2147483648
        %v972 = vxor.u32 %v910, 2147483648
        %v973 = vxor.u32 %v915, 2147483648
        %v974 = vmul.f32 %v970, 1.442695
        %v975 = vpow.pop %v974
        %v976 = vmul.f32 %v971, 1.442695
        %v977 = vpow.pop %v976
        %v978 = vmul.f32 %v972, 1.442695
        %v979 = vpow.pop %v978
        %v980 = vmul.f32 %v973, 1.442695
        %v981 = vpow.pop %v980
        %v982 = vadd.f32 %v975, 1.0
        %v983 = vadd.f32 %v977, 1.0
        %v984 = vadd.f32 %v979, 1.0
        %v985 = vadd.f32 %v981, 1.0
        %v986 = vrcp.pop %v982
        %v987 = vmul.f32 1.0, %v986
        %v988 = vrcp.pop %v983
        %v989 = vmul.f32 1.0, %v988
        %v990 = vrcp.pop %v984
        %v991 = vmul.f32 1.0, %v990
        %v992 = vrcp.pop %v985
        %v993 = vmul.f32 1.0, %v992
        %v994 = vmul.f32 %v959, %v398
        %v995 = vmul.f32 %v961, %v399
        %v996 = vmul.f32 %v963, %v400
        %v997 = vmul.f32 %v965, %v401
        %v998 = vmul.f32 %v935, %v966
        %v999 = vmul.f32 %v937, %v967
        %v1000 = vmul.f32 %v939, %v968
        %v1001 = vmul.f32 %v941, %v969
        %v1002 = vadd.f32 %v994, %v998
        %v1003 = vadd.f32 %v995, %v999
        %v1004 = vadd.f32 %v996, %v1000
        %v1005 = vadd.f32 %v997, %v1001
        %v1006 = vtanh.pop %v1002
        %v1007 = vtanh.pop %v1003
        %v1008 = vtanh.pop %v1004
        %v1009 = vtanh.pop %v1005
        %v1010 = vmul.f32 %v987, %v1006
        %v1011 = vmul.f32 %v989, %v1007
        %v1012 = vmul.f32 %v991, %v1008
        %v1013 = vmul.f32 %v993, %v1009
        %1014 = vst [vmem:[%s233] sm:$0xff] %v1010
        %1015 = vst [vmem:[%s233 + $0x8] sm:$0xff] %v1011
        %1016 = vst [vmem:[%s233 + $0x10] sm:$0xff] %v1012
        %1017 = vst [vmem:[%s233 + $0x18] sm:$0xff] %v1013
        %s1018 = scalar_lea.vmem %s209, 128 [#allocation4]
        %v1019 = vld [vmem:[%s1018] sm:$0xff]
        %v1020 = vld [vmem:[%s1018 + $0x8] sm:$0xff]
        %v1021 = vld [vmem:[%s1018 + $0x10] sm:$0xff]
        %v1022 = vld [vmem:[%s1018 + $0x18] sm:$0xff]
        %v1023 = vld [vmem:[%s1018 + $0x20] sm:$0xff]
        %v1024 = vld [vmem:[%s1018 + $0x28] sm:$0xff]
        %v1025 = vld [vmem:[%s1018 + $0x30] sm:$0xff]
        %v1026 = vld [vmem:[%s1018 + $0x38] sm:$0xff]
        %v1027 = vld [vmem:[%s1018 + $0x40] sm:$0xff]
        %v1028 = vld [vmem:[%s1018 + $0x48] sm:$0xff]
        %v1029 = vld [vmem:[%s1018 + $0x50] sm:$0xff]
        %v1030 = vld [vmem:[%s1018 + $0x58] sm:$0xff]
        %v1031 = vld [vmem:[%s1018 + $0x60] sm:$0xff]
        %v1032 = vld [vmem:[%s1018 + $0x68] sm:$0xff]
        %v1033 = vld [vmem:[%s1018 + $0x70] sm:$0xff]
        %v1034 = vld [vmem:[%s1018 + $0x78] sm:$0xff]
        %1035 = vmatprep.subr.mxu0 0.0
        %1036 = vmatpush1.msra.mxu0 %v720
        %1037 = vmatprep.subr.mxu0 0.0
        %1038 = vmatpush1.msra.mxu0 %v721
        %1039 = vmatprep.subr.mxu0 0.0
        %1040 = vmatpush1.msra.mxu0 %v722
        %1041 = vmatprep.subr.mxu0 0.0
        %1042 = vmatpush1.msra.mxu0 %v723
        %1043 = vmatprep.subr.mxu0 0.0
        %1044 = vmatpush1.msra.mxu0 0.0
        %1045 = vmatprep.subr.mxu0 0.0
        %1046 = vmatpush1.msra.mxu0 0.0
        %1047 = vmatprep.subr.mxu0 0.0
        %1048 = vmatpush1.msra.mxu0 0.0
        %1049 = vmatprep.subr.mxu0 0.0
        %1050 = vmatpush1.msra.mxu0 0.0
        %1051 = vmatprep.subr.mxu0 0.0
        %1052 = vmatpush1.msra.mxu0 0.0
        %1053 = vmatprep.subr.mxu0 0.0
        %1054 = vmatpush1.msra.mxu0 0.0
        %1055 = vmatprep.subr.mxu0 0.0
        %1056 = vmatpush1.msra.mxu0 0.0
        %1057 = vmatprep.subr.mxu0 0.0
        %1058 = vmatpush1.msra.mxu0 0.0
        %1059 = vmatprep.subr.mxu0 0.0
        %1060 = vmatpush1.msra.mxu0 0.0
        %1061 = vmatprep.subr.mxu0 0.0
        %1062 = vmatpush1.msra.mxu0 0.0
        %1063 = vmatprep.subr.mxu0 0.0
        %1064 = vmatpush1.msra.mxu0 0.0
        %1065 = vmatprep.subr.mxu0 0.0
        %1066 = vmatpush1.msra.mxu0 0.0
        %1067 = vmatprep.subr.mxu0 0.0
        %1068 = vmatpush1.msra.mxu0 0.0
        %1069 = vmatprep.subr.mxu0 0.0
        %1070 = vmatpush1.msra.mxu0 0.0
        %1071 = vmatprep.subr.mxu0 0.0
        %1072 = vmatpush1.msra.mxu0 0.0
        %1073 = vmatprep.subr.mxu0 0.0
        %1074 = vmatpush1.msra.mxu0 0.0
        %1075 = vmatprep.subr.mxu0 0.0
        %1076 = vmatpush1.msra.mxu0 0.0
        %1077 = vmatprep.subr.mxu0 0.0
        %1078 = vmatpush1.msra.mxu0 0.0
        %1079 = vmatprep.subr.mxu0 0.0
        %1080 = vmatpush1.msra.mxu0 0.0
        %1081 = vmatprep.subr.mxu0 0.0
        %1082 = vmatpush1.msra.mxu0 0.0
        %1083 = vmatprep.subr.mxu0 0.0
        %1084 = vmatpush1.msra.mxu0 0.0
        %1085 = vmatprep.subr.mxu0 0.0
        %1086 = vmatpush1.msra.mxu0 0.0
        %1087 = vmatprep.subr.mxu0 0.0
        %1088 = vmatpush1.msra.mxu0 0.0
        %1089 = vmatprep.subr.mxu0 0.0
        %1090 = vmatpush1.msra.mxu0 0.0
        %1091 = vmatprep.subr.mxu0 0.0
        %1092 = vmatpush1.msra.mxu0 0.0
        %1093 = vmatprep.subr.mxu0 0.0
        %1094 = vmatpush1.msra.mxu0 0.0
        %1095 = vmatprep.subr.mxu0 0.0
        %1096 = vmatpush1.msra.mxu0 0.0
        %1097 = vmatprep.subr.mxu0 0.0
        %1098 = vmatpush1.msra.mxu0 0.0
        %1099 = vmatprep.mubr.f32.mxu0 0.0
        %1100 = vmatmul.mubr.f32.gmra.mrb[0].mxu0 %v420
        %v1101 = vpop.f32.mrb[0].mxu0
        %v1102 = vadd.f32 0.0, %v1101
        %v1103 = vpop.f32.mrb[0].mxu0
        %1104 = vmatprep.mubr.f32.mxu0 0.0
        %1105 = vmatmul.mubr.f32.gmra.mrb[0].mxu0 %v423
        %v1106 = vpop.f32.mrb[0].mxu0
        %v1107 = vadd.f32 0.0, %v1106
        %v1108 = vpop.f32.mrb[0].mxu0
        %1109 = vmatprep.mubr.f32.mxu0 0.0
        %1110 = vmatmul.mubr.f32.gmra.mrb[0].mxu0 %v426
        %v1111 = vpop.f32.mrb[0].mxu0
        %v1112 = vadd.f32 0.0, %v1111
        %v1113 = vpop.f32.mrb[0].mxu0
        %1114 = vmatprep.mubr.f32.mxu0 0.0
        %1115 = vmatmul.mubr.f32.gmra.mrb[0].mxu0 %v429
        %v1116 = vpop.f32.mrb[0].mxu0
        %v1117 = vadd.f32 0.0, %v1116
        %v1118 = vpop.f32.mrb[0].mxu0
        %1119 = vmatprep.mubr.f32.mxu0 0.0
        %1120 = vmatmul.mubr.f32.gmra.mrb[0].mxu0 %v432
        %v1121 = vpop.f32.mrb[0].mxu0
        %v1122 = vadd.f32 0.0, %v1121
        %v1123 = vpop.f32.mrb[0].mxu0
        %1124 = vmatprep.mubr.f32.mxu0 0.0
        %1125 = vmatmul.mubr.f32.gmra.mrb[0].mxu0 %v435
        %v1126 = vpop.f32.mrb[0].mxu0
        %v1127 = vadd.f32 0.0, %v1126
        %v1128 = vpop.f32.mrb[0].mxu0
        %1129 = vmatprep.mubr.f32.mxu0 0.0
        %1130 = vmatmul.mubr.f32.gmra.mrb[0].mxu0 %v438
        %v1131 = vpop.f32.mrb[0].mxu0
        %v1132 = vadd.f32 0.0, %v1131
        %v1133 = vpop.f32.mrb[0].mxu0
        %1134 = vmatprep.mubr.f32.mxu0 0.0
        %1135 = vmatmul.mubr.f32.gmra.mrb[0].mxu0 %v441
        %v1136 = vpop.f32.mrb[0].mxu0
        %v1137 = vadd.f32 0.0, %v1136
        %v1138 = vpop.f32.mrb[0].mxu0
        %1139 = vmatprep.mubr.f32.mxu0 0.0
        %1140 = vmatmul.mubr.f32.gmra.mrb[0].mxu0 %v444
        %v1141 = vpop.f32.mrb[0].mxu0
        %v1142 = vadd.f32 0.0, %v1141
        %v1143 = vpop.f32.mrb[0].mxu0
        %1144 = vmatprep.mubr.f32.mxu0 0.0
        %1145 = vmatmul.mubr.f32.gmra.mrb[0].mxu0 %v447
        %v1146 = vpop.f32.mrb[0].mxu0
        %v1147 = vadd.f32 0.0, %v1146
        %v1148 = vpop.f32.mrb[0].mxu0
        %1149 = vmatprep.mubr.f32.mxu0 0.0
        %1150 = vmatmul.mubr.f32.gmra.mrb[0].mxu0 %v450
        %v1151 = vpop.f32.mrb[0].mxu0
        %v1152 = vadd.f32 0.0, %v1151
        %v1153 = vpop.f32.mrb[0].mxu0
        %1154 = vmatprep.mubr.f32.mxu0 0.0
        %1155 = vmatmul.mubr.f32.gmra.mrb[0].mxu0 %v453
        %v1156 = vpop.f32.mrb[0].mxu0
        %v1157 = vadd.f32 0.0, %v1156
        %v1158 = vpop.f32.mrb[0].mxu0
        %1159 = vmatprep.mubr.f32.mxu0 0.0
        %1160 = vmatmul.mubr.f32.gmra.mrb[0].mxu0 %v456
        %v1161 = vpop.f32.mrb[0].mxu0
        %v1162 = vadd.f32 0.0, %v1161
        %v1163 = vpop.f32.mrb[0].mxu0
        %1164 = vmatprep.mubr.f32.mxu0 0.0
        %1165 = vmatmul.mubr.f32.gmra.mrb[0].mxu0 %v459
        %v1166 = vpop.f32.mrb[0].mxu0
        %v1167 = vadd.f32 0.0, %v1166
        %v1168 = vpop.f32.mrb[0].mxu0
        %1169 = vmatprep.mubr.f32.mxu0 0.0
        %1170 = vmatmul.mubr.f32.gmra.mrb[0].mxu0 %v462
        %v1171 = vpop.f32.mrb[0].mxu0
        %v1172 = vadd.f32 0.0, %v1171
        %v1173 = vpop.f32.mrb[0].mxu0
        %1174 = vmatprep.mubr.f32.mxu0 0.0
        %1175 = vmatmul.mubr.f32.gmra.mrb[0].mxu0 %v465
        %v1176 = vpop.f32.mrb[0].mxu0
        %v1177 = vadd.f32 0.0, %v1176
        %v1178 = vpop.f32.mrb[0].mxu0
        %1179 = vdwg.mxu0
        %v1180 = vadd.f32 %v1019, %v1102
        %v1181 = vadd.f32 %v1020, %v1107
        %v1182 = vadd.f32 %v1021, %v1112
        %v1183 = vadd.f32 %v1022, %v1117
        %v1184 = vadd.f32 %v1023, %v1122
        %v1185 = vadd.f32 %v1024, %v1127
        %v1186 = vadd.f32 %v1025, %v1132
        %v1187 = vadd.f32 %v1026, %v1137
        %v1188 = vadd.f32 %v1027, %v1142
        %v1189 = vadd.f32 %v1028, %v1147
        %v1190 = vadd.f32 %v1029, %v1152
        %v1191 = vadd.f32 %v1030, %v1157
        %v1192 = vadd.f32 %v1031, %v1162
        %v1193 = vadd.f32 %v1032, %v1167
        %v1194 = vadd.f32 %v1033, %v1172
        %v1195 = vadd.f32 %v1034, %v1177
        %v1196 = vxor.u32 %v1180, 2147483648
        %v1197 = vxor.u32 %v1181, 2147483648
        %v1198 = vxor.u32 %v1182, 2147483648
        %v1199 = vxor.u32 %v1183, 2147483648
        %v1200 = vmul.f32 %v1196, 1.442695
        %v1201 = vpow.pop %v1200
        %v1202 = vmul.f32 %v1197, 1.442695
        %v1203 = vpow.pop %v1202
        %v1204 = vmul.f32 %v1198, 1.442695
        %v1205 = vpow.pop %v1204
        %v1206 = vmul.f32 %v1199, 1.442695
        %v1207 = vpow.pop %v1206
        %v1208 = vadd.f32 %v1201, 1.0
        %v1209 = vadd.f32 %v1203, 1.0
        %v1210 = vadd.f32 %v1205, 1.0
        %v1211 = vadd.f32 %v1207, 1.0
        %v1212 = vrcp.pop %v1208
        %v1213 = vmul.f32 1.0, %v1212
        %v1214 = vrcp.pop %v1209
        %v1215 = vmul.f32 1.0, %v1214
        %v1216 = vrcp.pop %v1210
        %v1217 = vmul.f32 1.0, %v1216
        %v1218 = vrcp.pop %v1211
        %v1219 = vmul.f32 1.0, %v1218
        %v1220 = vxor.u32 %v1184, 2147483648
        %v1221 = vxor.u32 %v1185, 2147483648
        %v1222 = vxor.u32 %v1186, 2147483648
        %v1223 = vxor.u32 %v1187, 2147483648
        %v1224 = vmul.f32 %v1220, 1.442695
        %v1225 = vpow.pop %v1224
        %v1226 = vmul.f32 %v1221, 1.442695
        %v1227 = vpow.pop %v1226
        %v1228 = vmul.f32 %v1222, 1.442695
        %v1229 = vpow.pop %v1228
        %v1230 = vmul.f32 %v1223, 1.442695
        %v1231 = vpow.pop %v1230
        %v1232 = vadd.f32 %v1225, 1.0
        %v1233 = vadd.f32 %v1227, 1.0
        %v1234 = vadd.f32 %v1229, 1.0
        %v1235 = vadd.f32 %v1231, 1.0
        %v1236 = vrcp.pop %v1232
        %v1237 = vmul.f32 1.0, %v1236
        %v1238 = vrcp.pop %v1233
        %v1239 = vmul.f32 1.0, %v1238
        %v1240 = vrcp.pop %v1234
        %v1241 = vmul.f32 1.0, %v1240
        %v1242 = vrcp.pop %v1235
        %v1243 = vmul.f32 1.0, %v1242
        %v1244 = vtanh.pop %v1188
        %v1245 = vtanh.pop %v1189
        %v1246 = vtanh.pop %v1190
        %v1247 = vtanh.pop %v1191
        %v1248 = vxor.u32 %v1192, 2147483648
        %v1249 = vxor.u32 %v1193, 2147483648
        %v1250 = vxor.u32 %v1194, 2147483648
        %v1251 = vxor.u32 %v1195, 2147483648
        %v1252 = vmul.f32 %v1248, 1.442695
        %v1253 = vpow.pop %v1252
        %v1254 = vmul.f32 %v1249, 1.442695
        %v1255 = vpow.pop %v1254
        %v1256 = vmul.f32 %v1250, 1.442695
        %v1257 = vpow.pop %v1256
        %v1258 = vmul.f32 %v1251, 1.442695
        %v1259 = vpow.pop %v1258
        %v1260 = vadd.f32 %v1253, 1.0
        %v1261 = vadd.f32 %v1255, 1.0
        %v1262 = vadd.f32 %v1257, 1.0
        %v1263 = vadd.f32 %v1259, 1.0
        %v1264 = vrcp.pop %v1260
        %v1265 = vmul.f32 1.0, %v1264
        %v1266 = vrcp.pop %v1261
        %v1267 = vmul.f32 1.0, %v1266
        %v1268 = vrcp.pop %v1262
        %v1269 = vmul.f32 1.0, %v1268
        %v1270 = vrcp.pop %v1263
        %v1271 = vmul.f32 1.0, %v1270
        %v1272 = vmul.f32 %v1237, %v712
        %v1273 = vmul.f32 %v1239, %v713
        %v1274 = vmul.f32 %v1241, %v714
        %v1275 = vmul.f32 %v1243, %v715
        %v1276 = vmul.f32 %v1213, %v1244
        %v1277 = vmul.f32 %v1215, %v1245
        %v1278 = vmul.f32 %v1217, %v1246
        %v1279 = vmul.f32 %v1219, %v1247
        %v1280 = vadd.f32 %v1272, %v1276
        %v1281 = vadd.f32 %v1273, %v1277
        %v1282 = vadd.f32 %v1274, %v1278
        %v1283 = vadd.f32 %v1275, %v1279
        %v1284 = vtanh.pop %v1280
        %v1285 = vtanh.pop %v1281
        %v1286 = vtanh.pop %v1282
        %v1287 = vtanh.pop %v1283
        %v1288 = vmul.f32 %v1265, %v1284
        %v1289 = vmul.f32 %v1267, %v1285
        %v1290 = vmul.f32 %v1269, %v1286
        %v1291 = vmul.f32 %v1271, %v1287
        %1292 = vmatprep.subr.mxu0 0.0
        %1293 = vmatpush1.msra.mxu0 %v1288
        %1294 = vmatprep.subr.mxu0 0.0
        %1295 = vmatpush1.msra.mxu0 %v1289
        %1296 = vmatprep.subr.mxu0 0.0
        %1297 = vmatpush1.msra.mxu0 %v1290
        %1298 = vmatprep.subr.mxu0 0.0
        %1299 = vmatpush1.msra.mxu0 %v1291
        %1300 = vmatprep.subr.mxu0 0.0
        %1301 = vmatpush1.msra.mxu0 %v1010
        %1302 = vmatprep.subr.mxu0 0.0
        %1303 = vmatpush1.msra.mxu0 %v1011
        %1304 = vmatprep.subr.mxu0 0.0
        %1305 = vmatpush1.msra.mxu0 %v1012
        %1306 = vmatprep.subr.mxu0 0.0
        %1307 = vmatpush1.msra.mxu0 %v1013
        %1308 = vmatprep.subr.mxu0 0.0
        %1309 = vmatpush1.msra.mxu0 0.0
        %1310 = vmatprep.subr.mxu0 0.0
        %1311 = vmatpush1.msra.mxu0 0.0
        %1312 = vmatprep.subr.mxu0 0.0
        %1313 = vmatpush1.msra.mxu0 0.0
        %1314 = vmatprep.subr.mxu0 0.0
        %1315 = vmatpush1.msra.mxu0 0.0
        %1316 = vmatprep.subr.mxu0 0.0
        %1317 = vmatpush1.msra.mxu0 0.0
        %1318 = vmatprep.subr.mxu0 0.0
        %1319 = vmatpush1.msra.mxu0 0.0
        %1320 = vmatprep.subr.mxu0 0.0
        %1321 = vmatpush1.msra.mxu0 0.0
        %1322 = vmatprep.subr.mxu0 0.0
        %1323 = vmatpush1.msra.mxu0 0.0
        %1324 = vmatprep.subr.mxu0 0.0
        %1325 = vmatpush1.msra.mxu0 0.0
        %1326 = vmatprep.subr.mxu0 0.0
        %1327 = vmatpush1.msra.mxu0 0.0
        %1328 = vmatprep.subr.mxu0 0.0
        %1329 = vmatpush1.msra.mxu0 0.0
        %1330 = vmatprep.subr.mxu0 0.0
        %1331 = vmatpush1.msra.mxu0 0.0
        %1332 = vmatprep.subr.mxu0 0.0
        %1333 = vmatpush1.msra.mxu0 0.0
        %1334 = vmatprep.subr.mxu0 0.0
        %1335 = vmatpush1.msra.mxu0 0.0
        %1336 = vmatprep.subr.mxu0 0.0
        %1337 = vmatpush1.msra.mxu0 0.0
        %1338 = vmatprep.subr.mxu0 0.0
        %1339 = vmatpush1.msra.mxu0 0.0
        %1340 = vmatprep.subr.mxu0 0.0
        %1341 = vmatpush1.msra.mxu0 0.0
        %1342 = vmatprep.subr.mxu0 0.0
        %1343 = vmatpush1.msra.mxu0 0.0
        %1344 = vmatprep.subr.mxu0 0.0
        %1345 = vmatpush1.msra.mxu0 0.0
        %1346 = vmatprep.subr.mxu0 0.0
        %1347 = vmatpush1.msra.mxu0 0.0
        %1348 = vmatprep.subr.mxu0 0.0
        %1349 = vmatpush1.msra.mxu0 0.0
        %1350 = vmatprep.subr.mxu0 0.0
        %1351 = vmatpush1.msra.mxu0 0.0
        %1352 = vmatprep.subr.mxu0 0.0
        %1353 = vmatpush1.msra.mxu0 0.0
        %1354 = vmatprep.subr.mxu0 0.0
        %1355 = vmatpush1.msra.mxu0 0.0
        %1356 = vmatprep.mubr.f32.mxu0 0.0
        %1357 = vmatmul.mubr.f32.gmra.mrb[0].mxu0 %v726
        %v1358 = vpop.f32.mrb[0].mxu0
        %v1359 = vadd.f32 %v307, %v1358
        %v1360 = vpop.f32.mrb[0].mxu0
        %1361 = vmatprep.mubr.f32.mxu0 0.0
        %1362 = vmatmul.mubr.f32.gmra.mrb[0].mxu0 %v729
        %v1363 = vpop.f32.mrb[0].mxu0
        %v1364 = vadd.f32 %v312, %v1363
        %v1365 = vpop.f32.mrb[0].mxu0
        %1366 = vmatprep.mubr.f32.mxu0 0.0
        %1367 = vmatmul.mubr.f32.gmra.mrb[0].mxu0 %v732
        %v1368 = vpop.f32.mrb[0].mxu0
        %v1369 = vadd.f32 %v317, %v1368
        %v1370 = vpop.f32.mrb[0].mxu0
        %1371 = vmatprep.mubr.f32.mxu0 0.0
        %1372 = vmatmul.mubr.f32.gmra.mrb[0].mxu0 %v735
        %v1373 = vpop.f32.mrb[0].mxu0
        %v1374 = vadd.f32 %v322, %v1373
        %v1375 = vpop.f32.mrb[0].mxu0
        %1376 = vmatprep.mubr.f32.mxu0 0.0
        %1377 = vmatmul.mubr.f32.gmra.mrb[0].mxu0 %v738
        %v1378 = vpop.f32.mrb[0].mxu0
        %v1379 = vadd.f32 %v327, %v1378
        %v1380 = vpop.f32.mrb[0].mxu0
        %1381 = vmatprep.mubr.f32.mxu0 0.0
        %1382 = vmatmul.mubr.f32.gmra.mrb[0].mxu0 %v741
        %v1383 = vpop.f32.mrb[0].mxu0
        %v1384 = vadd.f32 %v332, %v1383
        %v1385 = vpop.f32.mrb[0].mxu0
        %1386 = vmatprep.mubr.f32.mxu0 0.0
        %1387 = vmatmul.mubr.f32.gmra.mrb[0].mxu0 %v744
        %v1388 = vpop.f32.mrb[0].mxu0
        %v1389 = vadd.f32 %v337, %v1388
        %v1390 = vpop.f32.mrb[0].mxu0
        %1391 = vmatprep.mubr.f32.mxu0 0.0
        %1392 = vmatmul.mubr.f32.gmra.mrb[0].mxu0 %v747
        %v1393 = vpop.f32.mrb[0].mxu0
        %v1394 = vadd.f32 %v342, %v1393
        %v1395 = vpop.f32.mrb[0].mxu0
        %1396 = vmatprep.mubr.f32.mxu0 0.0
        %1397 = vmatmul.mubr.f32.gmra.mrb[0].mxu0 %v750
        %v1398 = vpop.f32.mrb[0].mxu0
        %v1399 = vadd.f32 %v347, %v1398
        %v1400 = vpop.f32.mrb[0].mxu0
        %1401 = vmatprep.mubr.f32.mxu0 0.0
        %1402 = vmatmul.mubr.f32.gmra.mrb[0].mxu0 %v753
        %v1403 = vpop.f32.mrb[0].mxu0
        %v1404 = vadd.f32 %v352, %v1403
        %v1405 = vpop.f32.mrb[0].mxu0
        %1406 = vmatprep.mubr.f32.mxu0 0.0
        %1407 = vmatmul.mubr.f32.gmra.mrb[0].mxu0 %v756
        %v1408 = vpop.f32.mrb[0].mxu0
        %v1409 = vadd.f32 %v357, %v1408
        %v1410 = vpop.f32.mrb[0].mxu0
        %1411 = vmatprep.mubr.f32.mxu0 0.0
        %1412 = vmatmul.mubr.f32.gmra.mrb[0].mxu0 %v759
        %v1413 = vpop.f32.mrb[0].mxu0
        %v1414 = vadd.f32 %v362, %v1413
        %v1415 = vpop.f32.mrb[0].mxu0
        %1416 = vmatprep.mubr.f32.mxu0 0.0
        %1417 = vmatmul.mubr.f32.gmra.mrb[0].mxu0 %v762
        %v1418 = vpop.f32.mrb[0].mxu0
        %v1419 = vadd.f32 %v367, %v1418
        %v1420 = vpop.f32.mrb[0].mxu0
        %1421 = vmatprep.mubr.f32.mxu0 0.0
        %1422 = vmatmul.mubr.f32.gmra.mrb[0].mxu0 %v765
        %v1423 = vpop.f32.mrb[0].mxu0
        %v1424 = vadd.f32 %v372, %v1423
        %v1425 = vpop.f32.mrb[0].mxu0
        %1426 = vmatprep.mubr.f32.mxu0 0.0
        %1427 = vmatmul.mubr.f32.gmra.mrb[0].mxu0 %v768
        %v1428 = vpop.f32.mrb[0].mxu0
        %v1429 = vadd.f32 %v377, %v1428
        %v1430 = vpop.f32.mrb[0].mxu0
        %1431 = vmatprep.mubr.f32.mxu0 0.0
        %1432 = vmatmul.mubr.f32.gmra.mrb[0].mxu0 %v771
        %v1433 = vpop.f32.mrb[0].mxu0
        %v1434 = vadd.f32 %v382, %v1433
        %v1435 = vpop.f32.mrb[0].mxu0
        %1436 = vdwg.mxu0
        %v1437 = vxor.u32 %v1359, 2147483648
        %v1438 = vxor.u32 %v1364, 2147483648
        %v1439 = vxor.u32 %v1369, 2147483648
        %v1440 = vxor.u32 %v1374, 2147483648
        %v1441 = vmul.f32 %v1437, 1.442695
        %v1442 = vpow.pop %v1441
        %v1443 = vmul.f32 %v1438, 1.442695
        %v1444 = vpow.pop %v1443
        %v1445 = vmul.f32 %v1439, 1.442695
        %v1446 = vpow.pop %v1445
        %v1447 = vmul.f32 %v1440, 1.442695
        %v1448 = vpow.pop %v1447
        %v1449 = vadd.f32 %v1442, 1.0
        %v1450 = vadd.f32 %v1444, 1.0
        %v1451 = vadd.f32 %v1446, 1.0
        %v1452 = vadd.f32 %v1448, 1.0
        %v1453 = vrcp.pop %v1449
        %v1454 = vmul.f32 1.0, %v1453
        %v1455 = vrcp.pop %v1450
        %v1456 = vmul.f32 1.0, %v1455
        %v1457 = vrcp.pop %v1451
        %v1458 = vmul.f32 1.0, %v1457
        %v1459 = vrcp.pop %v1452
        %v1460 = vmul.f32 1.0, %v1459
        %v1461 = vxor.u32 %v1379, 2147483648
        %v1462 = vxor.u32 %v1384, 2147483648
        %v1463 = vxor.u32 %v1389, 2147483648
        %v1464 = vxor.u32 %v1394, 2147483648
        %v1465 = vmul.f32 %v1461, 1.442695
        %v1466 = vpow.pop %v1465
        %v1467 = vmul.f32 %v1462, 1.442695
        %v1468 = vpow.pop %v1467
        %v1469 = vmul.f32 %v1463, 1.442695
        %v1470 = vpow.pop %v1469
        %v1471 = vmul.f32 %v1464, 1.442695
        %v1472 = vpow.pop %v1471
        %v1473 = vadd.f32 %v1466, 1.0
        %v1474 = vadd.f32 %v1468, 1.0
        %v1475 = vadd.f32 %v1470, 1.0
        %v1476 = vadd.f32 %v1472, 1.0
        %v1477 = vrcp.pop %v1473
        %v1478 = vmul.f32 1.0, %v1477
        %v1479 = vrcp.pop %v1474
        %v1480 = vmul.f32 1.0, %v1479
        %v1481 = vrcp.pop %v1475
        %v1482 = vmul.f32 1.0, %v1481
        %v1483 = vrcp.pop %v1476
        %v1484 = vmul.f32 1.0, %v1483
        %v1485 = vtanh.pop %v1399
        %v1486 = vtanh.pop %v1404
        %v1487 = vtanh.pop %v1409
        %v1488 = vtanh.pop %v1414
        %v1489 = vxor.u32 %v1419, 2147483648
        %v1490 = vxor.u32 %v1424, 2147483648
        %v1491 = vxor.u32 %v1429, 2147483648
        %v1492 = vxor.u32 %v1434, 2147483648
        %v1493 = vmul.f32 %v1489, 1.442695
        %v1494 = vpow.pop %v1493
        %v1495 = vmul.f32 %v1490, 1.442695
        %v1496 = vpow.pop %v1495
        %v1497 = vmul.f32 %v1491, 1.442695
        %v1498 = vpow.pop %v1497
        %v1499 = vmul.f32 %v1492, 1.442695
        %v1500 = vpow.pop %v1499
        %v1501 = vadd.f32 %v1494, 1.0
        %v1502 = vadd.f32 %v1496, 1.0
        %v1503 = vadd.f32 %v1498, 1.0
        %v1504 = vadd.f32 %v1500, 1.0
        %v1505 = vrcp.pop %v1501
        %v1506 = vmul.f32 1.0, %v1505
        %v1507 = vrcp.pop %v1502
        %v1508 = vmul.f32 1.0, %v1507
        %v1509 = vrcp.pop %v1503
        %v1510 = vmul.f32 1.0, %v1509
        %v1511 = vrcp.pop %v1504
        %v1512 = vmul.f32 1.0, %v1511
        %v1513 = vmul.f32 %v1478, %v1002
        %v1514 = vmul.f32 %v1480, %v1003
        %v1515 = vmul.f32 %v1482, %v1004
        %v1516 = vmul.f32 %v1484, %v1005
        %v1517 = vmul.f32 %v1454, %v1485
        %v1518 = vmul.f32 %v1456, %v1486
        %v1519 = vmul.f32 %v1458, %v1487
        %v1520 = vmul.f32 %v1460, %v1488
        %v1521 = vadd.f32 %v1513, %v1517
        %v1522 = vadd.f32 %v1514, %v1518
        %v1523 = vadd.f32 %v1515, %v1519
        %v1524 = vadd.f32 %v1516, %v1520
        %v1525 = vtanh.pop %v1521
        %v1526 = vtanh.pop %v1522
        %v1527 = vtanh.pop %v1523
        %v1528 = vtanh.pop %v1524
        %v1529 = vmul.f32 %v1506, %v1525
        %v1530 = vmul.f32 %v1508, %v1526
        %v1531 = vmul.f32 %v1510, %v1527
        %v1532 = vmul.f32 %v1512, %v1528
        %s1533 = scalar_lea.vmem %s233, 32 [#allocation7]
        %1534 = vst [vmem:[%s1533] sm:$0xff] %v1529
        %1535 = vst [vmem:[%s1533 + $0x8] sm:$0xff] %v1530
        %1536 = vst [vmem:[%s1533 + $0x10] sm:$0xff] %v1531
        %1537 = vst [vmem:[%s1533 + $0x18] sm:$0xff] %v1532
        %s1538 = scalar_lea.vmem %s209, 256 [#allocation4]
        %v1539 = vld [vmem:[%s1538] sm:$0xff]
        %v1540 = vld [vmem:[%s1538 + $0x8] sm:$0xff]
        %v1541 = vld [vmem:[%s1538 + $0x10] sm:$0xff]
        %v1542 = vld [vmem:[%s1538 + $0x18] sm:$0xff]
        %v1543 = vld [vmem:[%s1538 + $0x20] sm:$0xff]
        %v1544 = vld [vmem:[%s1538 + $0x28] sm:$0xff]
        %v1545 = vld [vmem:[%s1538 + $0x30] sm:$0xff]
        %v1546 = vld [vmem:[%s1538 + $0x38] sm:$0xff]
        %v1547 = vld [vmem:[%s1538 + $0x40] sm:$0xff]
        %v1548 = vld [vmem:[%s1538 + $0x48] sm:$0xff]
        %v1549 = vld [vmem:[%s1538 + $0x50] sm:$0xff]
        %v1550 = vld [vmem:[%s1538 + $0x58] sm:$0xff]
        %v1551 = vld [vmem:[%s1538 + $0x60] sm:$0xff]
        %v1552 = vld [vmem:[%s1538 + $0x68] sm:$0xff]
        %v1553 = vld [vmem:[%s1538 + $0x70] sm:$0xff]
        %v1554 = vld [vmem:[%s1538 + $0x78] sm:$0xff]
        %1555 = vmatprep.subr.mxu0 0.0
        %1556 = vmatpush1.msra.mxu0 %v1288
        %1557 = vmatprep.subr.mxu0 0.0
        %1558 = vmatpush1.msra.mxu0 %v1289
        %1559 = vmatprep.subr.mxu0 0.0
        %1560 = vmatpush1.msra.mxu0 %v1290
        %1561 = vmatprep.subr.mxu0 0.0
        %1562 = vmatpush1.msra.mxu0 %v1291
        %1563 = vmatprep.subr.mxu0 0.0
        %1564 = vmatpush1.msra.mxu0 0.0
        %1565 = vmatprep.subr.mxu0 0.0
        %1566 = vmatpush1.msra.mxu0 0.0
        %1567 = vmatprep.subr.mxu0 0.0
        %1568 = vmatpush1.msra.mxu0 0.0
        %1569 = vmatprep.subr.mxu0 0.0
        %1570 = vmatpush1.msra.mxu0 0.0
        %1571 = vmatprep.subr.mxu0 0.0
        %1572 = vmatpush1.msra.mxu0 0.0
        %1573 = vmatprep.subr.mxu0 0.0
        %1574 = vmatpush1.msra.mxu0 0.0
        %1575 = vmatprep.subr.mxu0 0.0
        %1576 = vmatpush1.msra.mxu0 0.0
        %1577 = vmatprep.subr.mxu0 0.0
        %1578 = vmatpush1.msra.mxu0 0.0
        %1579 = vmatprep.subr.mxu0 0.0
        %1580 = vmatpush1.msra.mxu0 0.0
        %1581 = vmatprep.subr.mxu0 0.0
        %1582 = vmatpush1.msra.mxu0 0.0
        %1583 = vmatprep.subr.mxu0 0.0
        %1584 = vmatpush1.msra.mxu0 0.0
        %1585 = vmatprep.subr.mxu0 0.0
        %1586 = vmatpush1.msra.mxu0 0.0
        %1587 = vmatprep.subr.mxu0 0.0
        %1588 = vmatpush1.msra.mxu0 0.0
        %1589 = vmatprep.subr.mxu0 0.0
        %1590 = vmatpush1.msra.mxu0 0.0
        %1591 = vmatprep.subr.mxu0 0.0
        %1592 = vmatpush1.msra.mxu0 0.0
        %1593 = vmatprep.subr.mxu0 0.0
        %1594 = vmatpush1.msra.mxu0 0.0
        %1595 = vmatprep.subr.mxu0 0.0
        %1596 = vmatpush1.msra.mxu0 0.0
        %1597 = vmatprep.subr.mxu0 0.0
        %1598 = vmatpush1.msra.mxu0 0.0
        %1599 = vmatprep.subr.mxu0 0.0
        %1600 = vmatpush1.msra.mxu0 0.0
        %1601 = vmatprep.subr.mxu0 0.0
        %1602 = vmatpush1.msra.mxu0 0.0
        %1603 = vmatprep.subr.mxu0 0.0
        %1604 = vmatpush1.msra.mxu0 0.0
        %1605 = vmatprep.subr.mxu0 0.0
        %1606 = vmatpush1.msra.mxu0 0.0
        %1607 = vmatprep.subr.mxu0 0.0
        %1608 = vmatpush1.msra.mxu0 0.0
        %1609 = vmatprep.subr.mxu0 0.0
        %1610 = vmatpush1.msra.mxu0 0.0
        %1611 = vmatprep.subr.mxu0 0.0
        %1612 = vmatpush1.msra.mxu0 0.0
        %1613 = vmatprep.subr.mxu0 0.0
        %1614 = vmatpush1.msra.mxu0 0.0
        %1615 = vmatprep.subr.mxu0 0.0
        %1616 = vmatpush1.msra.mxu0 0.0
        %1617 = vmatprep.subr.mxu0 0.0
        %1618 = vmatpush1.msra.mxu0 0.0
        %1619 = vmatprep.mubr.f32.mxu0 0.0
        %1620 = vmatmul.mubr.f32.gmra.mrb[0].mxu0 %v420
        %v1621 = vpop.f32.mrb[0].mxu0
        %v1622 = vadd.f32 0.0, %v1621
        %v1623 = vpop.f32.mrb[0].mxu0
        %1624 = vmatprep.mubr.f32.mxu0 0.0
        %1625 = vmatmul.mubr.f32.gmra.mrb[0].mxu0 %v423
        %v1626 = vpop.f32.mrb[0].mxu0
        %v1627 = vadd.f32 0.0, %v1626
        %v1628 = vpop.f32.mrb[0].mxu0
        %1629 = vmatprep.mubr.f32.mxu0 0.0
        %1630 = vmatmul.mubr.f32.gmra.mrb[0].mxu0 %v426
        %v1631 = vpop.f32.mrb[0].mxu0
        %v1632 = vadd.f32 0.0, %v1631
        %v1633 = vpop.f32.mrb[0].mxu0
        %1634 = vmatprep.mubr.f32.mxu0 0.0
        %1635 = vmatmul.mubr.f32.gmra.mrb[0].mxu0 %v429
        %v1636 = vpop.f32.mrb[0].mxu0
        %v1637 = vadd.f32 0.0, %v1636
        %v1638 = vpop.f32.mrb[0].mxu0
        %1639 = vmatprep.mubr.f32.mxu0 0.0
        %1640 = vmatmul.mubr.f32.gmra.mrb[0].mxu0 %v432
        %v1641 = vpop.f32.mrb[0].mxu0
        %v1642 = vadd.f32 0.0, %v1641
        %v1643 = vpop.f32.mrb[0].mxu0
        %1644 = vmatprep.mubr.f32.mxu0 0.0
        %1645 = vmatmul.mubr.f32.gmra.mrb[0].mxu0 %v435
        %v1646 = vpop.f32.mrb[0].mxu0
        %v1647 = vadd.f32 0.0, %v1646
        %v1648 = vpop.f32.mrb[0].mxu0
        %1649 = vmatprep.mubr.f32.mxu0 0.0
        %1650 = vmatmul.mubr.f32.gmra.mrb[0].mxu0 %v438
        %v1651 = vpop.f32.mrb[0].mxu0
        %v1652 = vadd.f32 0.0, %v1651
        %v1653 = vpop.f32.mrb[0].mxu0
        %1654 = vmatprep.mubr.f32.mxu0 0.0
        %1655 = vmatmul.mubr.f32.gmra.mrb[0].mxu0 %v441
        %v1656 = vpop.f32.mrb[0].mxu0
        %v1657 = vadd.f32 0.0, %v1656
        %v1658 = vpop.f32.mrb[0].mxu0
        %1659 = vmatprep.mubr.f32.mxu0 0.0
        %1660 = vmatmul.mubr.f32.gmra.mrb[0].mxu0 %v444
        %v1661 = vpop.f32.mrb[0].mxu0
        %v1662 = vadd.f32 0.0, %v1661
        %v1663 = vpop.f32.mrb[0].mxu0
        %1664 = vmatprep.mubr.f32.mxu0 0.0
        %1665 = vmatmul.mubr.f32.gmra.mrb[0].mxu0 %v447
        %v1666 = vpop.f32.mrb[0].mxu0
        %v1667 = vadd.f32 0.0, %v1666
        %v1668 = vpop.f32.mrb[0].mxu0
        %1669 = vmatprep.mubr.f32.mxu0 0.0
        %1670 = vmatmul.mubr.f32.gmra.mrb[0].mxu0 %v450
        %v1671 = vpop.f32.mrb[0].mxu0
        %v1672 = vadd.f32 0.0, %v1671
        %v1673 = vpop.f32.mrb[0].mxu0
        %1674 = vmatprep.mubr.f32.mxu0 0.0
        %1675 = vmatmul.mubr.f32.gmra.mrb[0].mxu0 %v453
        %v1676 = vpop.f32.mrb[0].mxu0
        %v1677 = vadd.f32 0.0, %v1676
        %v1678 = vpop.f32.mrb[0].mxu0
        %1679 = vmatprep.mubr.f32.mxu0 0.0
        %1680 = vmatmul.mubr.f32.gmra.mrb[0].mxu0 %v456
        %v1681 = vpop.f32.mrb[0].mxu0
        %v1682 = vadd.f32 0.0, %v1681
        %v1683 = vpop.f32.mrb[0].mxu0
        %1684 = vmatprep.mubr.f32.mxu0 0.0
        %1685 = vmatmul.mubr.f32.gmra.mrb[0].mxu0 %v459
        %v1686 = vpop.f32.mrb[0].mxu0
        %v1687 = vadd.f32 0.0, %v1686
        %v1688 = vpop.f32.mrb[0].mxu0
        %1689 = vmatprep.mubr.f32.mxu0 0.0
        %1690 = vmatmul.mubr.f32.gmra.mrb[0].mxu0 %v462
        %v1691 = vpop.f32.mrb[0].mxu0
        %v1692 = vadd.f32 0.0, %v1691
        %v1693 = vpop.f32.mrb[0].mxu0
        %1694 = vmatprep.mubr.f32.mxu0 0.0
        %1695 = vmatmul.mubr.f32.gmra.mrb[0].mxu0 %v465
        %v1696 = vpop.f32.mrb[0].mxu0
        %v1697 = vadd.f32 0.0, %v1696
        %v1698 = vpop.f32.mrb[0].mxu0
        %1699 = vdwg.mxu0
        %v1700 = vadd.f32 %v1539, %v1622
        %v1701 = vadd.f32 %v1540, %v1627
        %v1702 = vadd.f32 %v1541, %v1632
        %v1703 = vadd.f32 %v1542, %v1637
        %v1704 = vadd.f32 %v1543, %v1642
        %v1705 = vadd.f32 %v1544, %v1647
        %v1706 = vadd.f32 %v1545, %v1652
        %v1707 = vadd.f32 %v1546, %v1657
        %v1708 = vadd.f32 %v1547, %v1662
        %v1709 = vadd.f32 %v1548, %v1667
        %v1710 = vadd.f32 %v1549, %v1672
        %v1711 = vadd.f32 %v1550, %v1677
        %v1712 = vadd.f32 %v1551, %v1682
        %v1713 = vadd.f32 %v1552, %v1687
        %v1714 = vadd.f32 %v1553, %v1692
        %v1715 = vadd.f32 %v1554, %v1697
        %v1716 = vxor.u32 %v1700, 2147483648
        %v1717 = vxor.u32 %v1701, 2147483648
        %v1718 = vxor.u32 %v1702, 2147483648
        %v1719 = vxor.u32 %v1703, 2147483648
        %v1720 = vmul.f32 %v1716, 1.442695
        %v1721 = vpow.pop %v1720
        %v1722 = vmul.f32 %v1717, 1.442695
        %v1723 = vpow.pop %v1722
        %v1724 = vmul.f32 %v1718, 1.442695
        %v1725 = vpow.pop %v1724
        %v1726 = vmul.f32 %v1719, 1.442695
        %v1727 = vpow.pop %v1726
        %v1728 = vadd.f32 %v1721, 1.0
        %v1729 = vadd.f32 %v1723, 1.0
        %v1730 = vadd.f32 %v1725, 1.0
        %v1731 = vadd.f32 %v1727, 1.0
        %v1732 = vrcp.pop %v1728
        %v1733 = vmul.f32 1.0, %v1732
        %v1734 = vrcp.pop %v1729
        %v1735 = vmul.f32 1.0, %v1734
        %v1736 = vrcp.pop %v1730
        %v1737 = vmul.f32 1.0, %v1736
        %v1738 = vrcp.pop %v1731
        %v1739 = vmul.f32 1.0, %v1738
        %v1740 = vxor.u32 %v1704, 2147483648
        %v1741 = vxor.u32 %v1705, 2147483648
        %v1742 = vxor.u32 %v1706, 2147483648
        %v1743 = vxor.u32 %v1707, 2147483648
        %v1744 = vmul.f32 %v1740, 1.442695
        %v1745 = vpow.pop %v1744
        %v1746 = vmul.f32 %v1741, 1.442695
        %v1747 = vpow.pop %v1746
        %v1748 = vmul.f32 %v1742, 1.442695
        %v1749 = vpow.pop %v1748
        %v1750 = vmul.f32 %v1743, 1.442695
        %v1751 = vpow.pop %v1750
        %v1752 = vadd.f32 %v1745, 1.0
        %v1753 = vadd.f32 %v1747, 1.0
        %v1754 = vadd.f32 %v1749, 1.0
        %v1755 = vadd.f32 %v1751, 1.0
        %v1756 = vrcp.pop %v1752
        %v1757 = vmul.f32 1.0, %v1756
        %v1758 = vrcp.pop %v1753
        %v1759 = vmul.f32 1.0, %v1758
        %v1760 = vrcp.pop %v1754
        %v1761 = vmul.f32 1.0, %v1760
        %v1762 = vrcp.pop %v1755
        %v1763 = vmul.f32 1.0, %v1762
        %v1764 = vtanh.pop %v1708
        %v1765 = vtanh.pop %v1709
        %v1766 = vtanh.pop %v1710
        %v1767 = vtanh.pop %v1711
        %v1768 = vxor.u32 %v1712, 2147483648
        %v1769 = vxor.u32 %v1713, 2147483648
        %v1770 = vxor.u32 %v1714, 2147483648
        %v1771 = vxor.u32 %v1715, 2147483648
        %v1772 = vmul.f32 %v1768, 1.442695
        %v1773 = vpow.pop %v1772
        %v1774 = vmul.f32 %v1769, 1.442695
        %v1775 = vpow.pop %v1774
        %v1776 = vmul.f32 %v1770, 1.442695
        %v1777 = vpow.pop %v1776
        %v1778 = vmul.f32 %v1771, 1.442695
        %v1779 = vpow.pop %v1778
        %v1780 = vadd.f32 %v1773, 1.0
        %v1781 = vadd.f32 %v1775, 1.0
        %v1782 = vadd.f32 %v1777, 1.0
        %v1783 = vadd.f32 %v1779, 1.0
        %v1784 = vrcp.pop %v1780
        %v1785 = vmul.f32 1.0, %v1784
        %v1786 = vrcp.pop %v1781
        %v1787 = vmul.f32 1.0, %v1786
        %v1788 = vrcp.pop %v1782
        %v1789 = vmul.f32 1.0, %v1788
        %v1790 = vrcp.pop %v1783
        %v1791 = vmul.f32 1.0, %v1790
        %v1792 = vmul.f32 %v1757, %v1280
        %v1793 = vmul.f32 %v1759, %v1281
        %v1794 = vmul.f32 %v1761, %v1282
        %v1795 = vmul.f32 %v1763, %v1283
        %v1796 = vmul.f32 %v1733, %v1764
        %v1797 = vmul.f32 %v1735, %v1765
        %v1798 = vmul.f32 %v1737, %v1766
        %v1799 = vmul.f32 %v1739, %v1767
        %v1800 = vadd.f32 %v1792, %v1796
        %v1801 = vadd.f32 %v1793, %v1797
        %v1802 = vadd.f32 %v1794, %v1798
        %v1803 = vadd.f32 %v1795, %v1799
        %v1804 = vtanh.pop %v1800
        %v1805 = vtanh.pop %v1801
        %v1806 = vtanh.pop %v1802
        %v1807 = vtanh.pop %v1803
        %v1808 = vmul.f32 %v1785, %v1804
        %v1809 = vmul.f32 %v1787, %v1805
        %v1810 = vmul.f32 %v1789, %v1806
        %v1811 = vmul.f32 %v1791, %v1807
        %1812 = vmatprep.subr.mxu0 0.0
        %1813 = vmatpush1.msra.mxu0 %v1808
        %1814 = vmatprep.subr.mxu0 0.0
        %1815 = vmatpush1.msra.mxu0 %v1809
        %1816 = vmatprep.subr.mxu0 0.0
        %1817 = vmatpush1.msra.mxu0 %v1810
        %1818 = vmatprep.subr.mxu0 0.0
        %1819 = vmatpush1.msra.mxu0 %v1811
        %1820 = vmatprep.subr.mxu0 0.0
        %1821 = vmatpush1.msra.mxu0 %v1529
        %1822 = vmatprep.subr.mxu0 0.0
        %1823 = vmatpush1.msra.mxu0 %v1530
        %1824 = vmatprep.subr.mxu0 0.0
        %1825 = vmatpush1.msra.mxu0 %v1531
        %1826 = vmatprep.subr.mxu0 0.0
        %1827 = vmatpush1.msra.mxu0 %v1532
        %1828 = vmatprep.subr.mxu0 0.0
        %1829 = vmatpush1.msra.mxu0 0.0
        %1830 = vmatprep.subr.mxu0 0.0
        %1831 = vmatpush1.msra.mxu0 0.0
        %1832 = vmatprep.subr.mxu0 0.0
        %1833 = vmatpush1.msra.mxu0 0.0
        %1834 = vmatprep.subr.mxu0 0.0
        %1835 = vmatpush1.msra.mxu0 0.0
        %1836 = vmatprep.subr.mxu0 0.0
        %1837 = vmatpush1.msra.mxu0 0.0
        %1838 = vmatprep.subr.mxu0 0.0
        %1839 = vmatpush1.msra.mxu0 0.0
        %1840 = vmatprep.subr.mxu0 0.0
        %1841 = vmatpush1.msra.mxu0 0.0
        %1842 = vmatprep.subr.mxu0 0.0
        %1843 = vmatpush1.msra.mxu0 0.0
        %1844 = vmatprep.subr.mxu0 0.0
        %1845 = vmatpush1.msra.mxu0 0.0
        %1846 = vmatprep.subr.mxu0 0.0
        %1847 = vmatpush1.msra.mxu0 0.0
        %1848 = vmatprep.subr.mxu0 0.0
        %1849 = vmatpush1.msra.mxu0 0.0
        %1850 = vmatprep.subr.mxu0 0.0
        %1851 = vmatpush1.msra.mxu0 0.0
        %1852 = vmatprep.subr.mxu0 0.0
        %1853 = vmatpush1.msra.mxu0 0.0
        %1854 = vmatprep.subr.mxu0 0.0
        %1855 = vmatpush1.msra.mxu0 0.0
        %1856 = vmatprep.subr.mxu0 0.0
        %1857 = vmatpush1.msra.mxu0 0.0
        %1858 = vmatprep.subr.mxu0 0.0
        %1859 = vmatpush1.msra.mxu0 0.0
        %1860 = vmatprep.subr.mxu0 0.0
        %1861 = vmatpush1.msra.mxu0 0.0
        %1862 = vmatprep.subr.mxu0 0.0
        %1863 = vmatpush1.msra.mxu0 0.0
        %1864 = vmatprep.subr.mxu0 0.0
        %1865 = vmatpush1.msra.mxu0 0.0
        %1866 = vmatprep.subr.mxu0 0.0
        %1867 = vmatpush1.msra.mxu0 0.0
        %1868 = vmatprep.subr.mxu0 0.0
        %1869 = vmatpush1.msra.mxu0 0.0
        %1870 = vmatprep.subr.mxu0 0.0
        %1871 = vmatpush1.msra.mxu0 0.0
        %1872 = vmatprep.subr.mxu0 0.0
        %1873 = vmatpush1.msra.mxu0 0.0
        %1874 = vmatprep.subr.mxu0 0.0
        %1875 = vmatpush1.msra.mxu0 0.0
        %1876 = vmatprep.mubr.f32.mxu0 0.0
        %1877 = vmatmul.mubr.f32.gmra.mrb[0].mxu0 %v726
        %v1878 = vpop.f32.mrb[0].mxu0
        %v1879 = vadd.f32 %v307, %v1878
        %v1880 = vpop.f32.mrb[0].mxu0
        %1881 = vmatprep.mubr.f32.mxu0 0.0
        %1882 = vmatmul.mubr.f32.gmra.mrb[0].mxu0 %v729
        %v1883 = vpop.f32.mrb[0].mxu0
        %v1884 = vadd.f32 %v312, %v1883
        %v1885 = vpop.f32.mrb[0].mxu0
        %1886 = vmatprep.mubr.f32.mxu0 0.0
        %1887 = vmatmul.mubr.f32.gmra.mrb[0].mxu0 %v732
        %v1888 = vpop.f32.mrb[0].mxu0
        %v1889 = vadd.f32 %v317, %v1888
        %v1890 = vpop.f32.mrb[0].mxu0
        %1891 = vmatprep.mubr.f32.mxu0 0.0
        %1892 = vmatmul.mubr.f32.gmra.mrb[0].mxu0 %v735
        %v1893 = vpop.f32.mrb[0].mxu0
        %v1894 = vadd.f32 %v322, %v1893
        %v1895 = vpop.f32.mrb[0].mxu0
        %1896 = vmatprep.mubr.f32.mxu0 0.0
        %1897 = vmatmul.mubr.f32.gmra.mrb[0].mxu0 %v738
        %v1898 = vpop.f32.mrb[0].mxu0
        %v1899 = vadd.f32 %v327, %v1898
        %v1900 = vpop.f32.mrb[0].mxu0
        %1901 = vmatprep.mubr.f32.mxu0 0.0
        %1902 = vmatmul.mubr.f32.gmra.mrb[0].mxu0 %v741
        %v1903 = vpop.f32.mrb[0].mxu0
        %v1904 = vadd.f32 %v332, %v1903
        %v1905 = vpop.f32.mrb[0].mxu0
        %1906 = vmatprep.mubr.f32.mxu0 0.0
        %1907 = vmatmul.mubr.f32.gmra.mrb[0].mxu0 %v744
        %v1908 = vpop.f32.mrb[0].mxu0
        %v1909 = vadd.f32 %v337, %v1908
        %v1910 = vpop.f32.mrb[0].mxu0
        %1911 = vmatprep.mubr.f32.mxu0 0.0
        %1912 = vmatmul.mubr.f32.gmra.mrb[0].mxu0 %v747
        %v1913 = vpop.f32.mrb[0].mxu0
        %v1914 = vadd.f32 %v342, %v1913
        %v1915 = vpop.f32.mrb[0].mxu0
        %1916 = vmatprep.mubr.f32.mxu0 0.0
        %1917 = vmatmul.mubr.f32.gmra.mrb[0].mxu0 %v750
        %v1918 = vpop.f32.mrb[0].mxu0
        %v1919 = vadd.f32 %v347, %v1918
        %v1920 = vpop.f32.mrb[0].mxu0
        %1921 = vmatprep.mubr.f32.mxu0 0.0
        %1922 = vmatmul.mubr.f32.gmra.mrb[0].mxu0 %v753
        %v1923 = vpop.f32.mrb[0].mxu0
        %v1924 = vadd.f32 %v352, %v1923
        %v1925 = vpop.f32.mrb[0].mxu0
        %1926 = vmatprep.mubr.f32.mxu0 0.0
        %1927 = vmatmul.mubr.f32.gmra.mrb[0].mxu0 %v756
        %v1928 = vpop.f32.mrb[0].mxu0
        %v1929 = vadd.f32 %v357, %v1928
        %v1930 = vpop.f32.mrb[0].mxu0
        %1931 = vmatprep.mubr.f32.mxu0 0.0
        %1932 = vmatmul.mubr.f32.gmra.mrb[0].mxu0 %v759
        %v1933 = vpop.f32.mrb[0].mxu0
        %v1934 = vadd.f32 %v362, %v1933
        %v1935 = vpop.f32.mrb[0].mxu0
        %1936 = vmatprep.mubr.f32.mxu0 0.0
        %1937 = vmatmul.mubr.f32.gmra.mrb[0].mxu0 %v762
        %v1938 = vpop.f32.mrb[0].mxu0
        %v1939 = vadd.f32 %v367, %v1938
        %v1940 = vpop.f32.mrb[0].mxu0
        %1941 = vmatprep.mubr.f32.mxu0 0.0
        %1942 = vmatmul.mubr.f32.gmra.mrb[0].mxu0 %v765
        %v1943 = vpop.f32.mrb[0].mxu0
        %v1944 = vadd.f32 %v372, %v1943
        %v1945 = vpop.f32.mrb[0].mxu0
        %1946 = vmatprep.mubr.f32.mxu0 0.0
        %1947 = vmatmul.mubr.f32.gmra.mrb[0].mxu0 %v768
        %v1948 = vpop.f32.mrb[0].mxu0
        %v1949 = vadd.f32 %v377, %v1948
        %v1950 = vpop.f32.mrb[0].mxu0
        %1951 = vmatprep.mubr.f32.mxu0 0.0
        %1952 = vmatmul.mubr.f32.gmra.mrb[0].mxu0 %v771
        %v1953 = vpop.f32.mrb[0].mxu0
        %v1954 = vadd.f32 %v382, %v1953
        %v1955 = vpop.f32.mrb[0].mxu0
        %1956 = vdwg.mxu0
        %v1957 = vxor.u32 %v1879, 2147483648
        %v1958 = vxor.u32 %v1884, 2147483648
        %v1959 = vxor.u32 %v1889, 2147483648
        %v1960 = vxor.u32 %v1894, 2147483648
        %v1961 = vmul.f32 %v1957, 1.442695
        %v1962 = vpow.pop %v1961
        %v1963 = vmul.f32 %v1958, 1.442695
        %v1964 = vpow.pop %v1963
        %v1965 = vmul.f32 %v1959, 1.442695
        %v1966 = vpow.pop %v1965
        %v1967 = vmul.f32 %v1960, 1.442695
        %v1968 = vpow.pop %v1967
        %v1969 = vadd.f32 %v1962, 1.0
        %v1970 = vadd.f32 %v1964, 1.0
        %v1971 = vadd.f32 %v1966, 1.0
        %v1972 = vadd.f32 %v1968, 1.0
        %v1973 = vrcp.pop %v1969
        %v1974 = vmul.f32 1.0, %v1973
        %v1975 = vrcp.pop %v1970
        %v1976 = vmul.f32 1.0, %v1975
        %v1977 = vrcp.pop %v1971
        %v1978 = vmul.f32 1.0, %v1977
        %v1979 = vrcp.pop %v1972
        %v1980 = vmul.f32 1.0, %v1979
        %v1981 = vxor.u32 %v1899, 2147483648
        %v1982 = vxor.u32 %v1904, 2147483648
        %v1983 = vxor.u32 %v1909, 2147483648
        %v1984 = vxor.u32 %v1914, 2147483648
        %v1985 = vmul.f32 %v1981, 1.442695
        %v1986 = vpow.pop %v1985
        %v1987 = vmul.f32 %v1982, 1.442695
        %v1988 = vpow.pop %v1987
        %v1989 = vmul.f32 %v1983, 1.442695
        %v1990 = vpow.pop %v1989
        %v1991 = vmul.f32 %v1984, 1.442695
        %v1992 = vpow.pop %v1991
        %v1993 = vadd.f32 %v1986, 1.0
        %v1994 = vadd.f32 %v1988, 1.0
        %v1995 = vadd.f32 %v1990, 1.0
        %v1996 = vadd.f32 %v1992, 1.0
        %v1997 = vrcp.pop %v1993
        %v1998 = vmul.f32 1.0, %v1997
        %v1999 = vrcp.pop %v1994
        %v2000 = vmul.f32 1.0, %v1999
        %v2001 = vrcp.pop %v1995
        %v2002 = vmul.f32 1.0, %v2001
        %v2003 = vrcp.pop %v1996
        %v2004 = vmul.f32 1.0, %v2003
        %v2005 = vtanh.pop %v1919
        %v2006 = vtanh.pop %v1924
        %v2007 = vtanh.pop %v1929
        %v2008 = vtanh.pop %v1934
        %v2009 = vxor.u32 %v1939, 2147483648
        %v2010 = vxor.u32 %v1944, 2147483648
        %v2011 = vxor.u32 %v1949, 2147483648
        %v2012 = vxor.u32 %v1954, 2147483648
        %v2013 = vmul.f32 %v2009, 1.442695
        %v2014 = vpow.pop %v2013
        %v2015 = vmul.f32 %v2010, 1.442695
        %v2016 = vpow.pop %v2015
        %v2017 = vmul.f32 %v2011, 1.442695
        %v2018 = vpow.pop %v2017
        %v2019 = vmul.f32 %v2012, 1.442695
        %v2020 = vpow.pop %v2019
        %v2021 = vadd.f32 %v2014, 1.0
        %v2022 = vadd.f32 %v2016, 1.0
        %v2023 = vadd.f32 %v2018, 1.0
        %v2024 = vadd.f32 %v2020, 1.0
        %v2025 = vrcp.pop %v2021
        %v2026 = vmul.f32 1.0, %v2025
        %v2027 = vrcp.pop %v2022
        %v2028 = vmul.f32 1.0, %v2027
        %v2029 = vrcp.pop %v2023
        %v2030 = vmul.f32 1.0, %v2029
        %v2031 = vrcp.pop %v2024
        %v2032 = vmul.f32 1.0, %v2031
        %v2033 = vmul.f32 %v1998, %v1521
        %v2034 = vmul.f32 %v2000, %v1522
        %v2035 = vmul.f32 %v2002, %v1523
        %v2036 = vmul.f32 %v2004, %v1524
        %v2037 = vmul.f32 %v1974, %v2005
        %v2038 = vmul.f32 %v1976, %v2006
        %v2039 = vmul.f32 %v1978, %v2007
        %v2040 = vmul.f32 %v1980, %v2008
        %v2041 = vadd.f32 %v2033, %v2037
        %v2042 = vadd.f32 %v2034, %v2038
        %v2043 = vadd.f32 %v2035, %v2039
        %v2044 = vadd.f32 %v2036, %v2040
        %v2045 = vtanh.pop %v2041
        %v2046 = vtanh.pop %v2042
        %v2047 = vtanh.pop %v2043
        %v2048 = vtanh.pop %v2044
        %v2049 = vmul.f32 %v2026, %v2045
        %v2050 = vmul.f32 %v2028, %v2046
        %v2051 = vmul.f32 %v2030, %v2047
        %v2052 = vmul.f32 %v2032, %v2048
        %s2053 = scalar_lea.vmem %s233, 64 [#allocation7]
        %2054 = vst [vmem:[%s2053] sm:$0xff] %v2049
        %2055 = vst [vmem:[%s2053 + $0x8] sm:$0xff] %v2050
        %2056 = vst [vmem:[%s2053 + $0x10] sm:$0xff] %v2051
        %2057 = vst [vmem:[%s2053 + $0x18] sm:$0xff] %v2052
        %2058 = vst [vmem:[#allocation2] sm:$0xff] %v1808
        %2059 = vst [vmem:[#allocation2 + $0x8] sm:$0xff] %v1809
        %2060 = vst [vmem:[#allocation2 + $0x10] sm:$0xff] %v1810
        %2061 = vst [vmem:[#allocation2 + $0x18] sm:$0xff] %v1811
        %2062 = vst [vmem:[#allocation3] sm:$0xff] %v1800
        %2063 = vst [vmem:[#allocation3 + $0x8] sm:$0xff] %v1801
        %2064 = vst [vmem:[#allocation3 + $0x10] sm:$0xff] %v1802
        %2065 = vst [vmem:[#allocation3 + $0x18] sm:$0xff] %v1803
        %2066 = vst [vmem:[%s388] sm:$0xff] %v2049
        %2067 = vst [vmem:[%s388 + $0x8] sm:$0xff] %v2050
        %2068 = vst [vmem:[%s388 + $0x10] sm:$0xff] %v2051
        %2069 = vst [vmem:[%s388 + $0x18] sm:$0xff] %v2052
        %2070 = vst [vmem:[%s397] sm:$0xff] %v2041
        %2071 = vst [vmem:[%s397 + $0x8] sm:$0xff] %v2042
        %2072 = vst [vmem:[%s397 + $0x10] sm:$0xff] %v2043
        %2073 = vst [vmem:[%s397 + $0x18] sm:$0xff] %v2044
        %s2074 = sand.u32 %s134, 1
        %s2075 = scalar_lea.sflag [#allocation6], %s2074
        %s2076 = sand.u32 %s134, 1
        %s2077 = smul.addr %s2076, 96
        %s2078 = scalar_lea.vmem [#allocation7], %s2077
        // Predicated region
        $region45: #{tpu_custom_call.1} parent=35 // pred_check
          %p2079 = pneg %p144
        $region46: #{tpu_custom_call.1} parent=35 // pred_check_branch
          %2081 = sbr.rel (%p2079) target = $region48
        $region47: #{tpu_custom_call.1} parent=35 // pred_region
          %s2082 = smul.u32 3, %s26
          %s2084 = ssub.s32 1536, 1536
          %2085 = vsyncadd %s2075, %s2084
          %s2086 = smul.addr %s2082, 4
          %s2087 = sadd.s32 %s25, %s2086
          %s2088 = smul.addr %s2087, 128
          %s2089 = scalar_lea.hbm %s4, %s2088
          %s2090 = sshll.u32 %s2078, 4
          %s2091 = int_to_ptr.vmem [resolvable:$true] %s2090
          %2096 = dma.vmem_to_hbm [thread:$0]  %s2091, 1536, %s2089, %s2075, 128, 128, 8
        $region48: #{tpu_custom_call.1} parent=35 // pred_fallthru
          _
      $region36: #{tpu_custom_call.1} parent=5 // pred_fallthru
        _
      %p2097 = scmp.le.s32.totalorder 2, %s16
      // Predicated region
      $region49: #{tpu_custom_call.1} parent=5 // pred_check
        %p2098 = pneg %p2097
      $region50: #{tpu_custom_call.1} parent=5 // pred_check_branch
        %2100 = sbr.rel (%p2098) target = $region52
      $region51: #{tpu_custom_call.1} parent=5 // pred_region
        %s2101 = ssub.s32 %s16, 2
        // Predicated region
        $region53: #{tpu_custom_call.1} parent=51 // pred_check
          %p2102 = pneg %p150
        $region54: #{tpu_custom_call.1} parent=51 // pred_check_branch
          %2104 = sbr.rel (%p2102) target = $region56
        $region55: #{tpu_custom_call.1} parent=51 // pred_region
          %s2105 = sand.u32 %s135, 1
          %s2106 = scalar_lea.sflag [#allocation6], %s2105
          %s2107 = sand.u32 %s135, 1
          %s2108 = smul.addr %s2107, 96
          %s2109 = scalar_lea.vmem [#allocation7], %s2108
          %2110 = dma.done %s2106, 1536
        $region56: #{tpu_custom_call.1} parent=51 // pred_fallthru
          _
      $region52: #{tpu_custom_call.1} parent=5 // pred_fallthru
        _
    $region6: #{tpu_custom_call.1} parent=1 // loop_footer
      %s20 = sadd.s32 1, %s16
    $region7: #{tpu_custom_call.1} parent=1 // loop_footer_branch
      %15 = sbr.rel target = $region3
    $region8: #{tpu_custom_call.1} parent=1 // loop_exit
      _
    %2111 = vsyncpa [#allocation5], 1
    %s2112 = scalar_lea.sflag [#allocation5], 1
    %2113 = vsyncpa %s2112, 1
    %2114 = vsyncpa [#allocation6], 1
    %s2115 = scalar_lea.sflag [#allocation6], 1
    %2116 = vsyncpa %s2115, 1

</llo_original>
